<compile_context>
chip_gen: v7x
topology: tpu7x:2x2x1
jax: 0.10.0
libtpu: 0.0.40
codegen_flags: <defaults>
</compile_context>

<pallas_src>
import math

import jax
import jax.numpy as jnp
from jax import lax
from jax.experimental import pallas as pl
from jax.experimental.pallas import tpu as pltpu

NEG_BIG = -0.7 * float(jnp.finfo(jnp.float32).max)
RMS_EPS = 1e-6


def _rms(x, w):
    # RMSNorm: x * rsqrt(mean(x^2, -1) + eps) * weight   (all in f32)
    ms = jnp.mean(x * x, axis=-1, keepdims=True)
    return x * lax.rsqrt(ms + RMS_EPS) * w


def make_perceiver_kernel(n_head, c_out, ls, lg, gpb, mxu_dtype=jnp.bfloat16):
    """Fused PerceiverEncoder forward for `gpb` local groups per grid step."""
    hd = c_out // n_head
    scale = 1.0 / math.sqrt(hd)          # muP = False

    def kernel(xf_ref, wall_ref, lnqk_ref, wproj_ref, out_ref):
        xf = xf_ref[...].astype(mxu_dtype)                 # (gpb*lg, Cin)

        # Fused enc_to_q / enc_to_kv: one MXU pass with N = 3*Cout (vs three padded N=Cout).
        qkv = jnp.dot(xf, wall_ref[...], preferred_element_type=jnp.float32)   # (gpb*lg, 3*Cout)
        q = qkv[:, :c_out]                                 # extra q rows are free under MXU pad
        k = qkv[:, c_out:2 * c_out]
        v = qkv[:, 2 * c_out:]

        w_ln = lnqk_ref[...]                               # (1, Cout) f32

        # Leading-dim split only (lg multiple of 8 -> cheap); latent rows = last ls per group.
        q3 = q.reshape(gpb, lg, c_out)[:, lg - ls:, :]     # (gpb, ls, Cout)
        q3 = _rms(q3, w_ln) * scale                        # ln_qk(q), attn scale folded in-kernel
        k3 = _rms(k, w_ln).reshape(gpb, lg, c_out)         # ln_qk(k)
        v3 = v.reshape(gpb, lg, c_out)                     # v is NOT normalized

        # Single bf16 cast of each attention operand; accumulation stays f32 on the MXU.
        q3 = q3.astype(mxu_dtype)
        k3 = k3.astype(mxu_dtype)
        v3 = v3.astype(mxu_dtype)
        wp = wproj_ref[...]                                # (Cout, Cout) bf16

        # Bottom-right aligned causal mask: latent query i sits at absolute position lg-ls+i,
        # so it may attend to keys j <= lg-ls+i  (== torch.triu(..., diagonal=lg-ls+1) mask).
        row = lax.broadcasted_iota(jnp.int32, (1, ls, lg), 1)
        col = lax.broadcasted_iota(jnp.int32, (1, ls, lg), 2)
        keep = col <= row + (lg - ls)

        acc = jnp.zeros((gpb * ls, c_out), jnp.float32)
        for h in range(n_head):                            # static unroll over heads
            sl = slice(h * hd, (h + 1) * hd)
            # Scores for all packed groups at once; K-transpose folded into the batched dot.
            s = jnp.einsum('gqd,gkd->gqk', q3[:, :, sl], k3[:, :, sl],
                           preferred_element_type=jnp.float32)        # (gpb, ls, lg)
            s = jnp.where(keep, s, NEG_BIG)
            s = s - jnp.max(s, axis=-1, keepdims=True)
            p = jnp.exp(s)
            p = p * pl.reciprocal(jnp.sum(p, axis=-1, keepdims=True), approx=False)
            y_h = jnp.einsum('gqk,gkd->gqd', p.astype(mxu_dtype), v3[:, :, sl],
                             preferred_element_type=jnp.float32)      # (gpb, ls, hd)
            # enc_proj_to_embd folded per head: out = sum_h y_h @ Wproj[h*hd:(h+1)*hd, :]
            # (avoids a lane-concat of head outputs; plain 2-D MXU matmul).
            y_h = y_h.reshape(gpb * ls, hd).astype(mxu_dtype)
            acc = acc + jnp.dot(y_h, wp[sl, :], preferred_element_type=jnp.float32)

        out_ref[...] = acc                                 # one store of the whole block

    return kernel


def init_params(key, c_in, c_out, scale=0.02):
    """Synthetic parameters (our own (in, out)-layout weights, equivalent to torch x @ W.T)."""
    k0, k1, k2 = jax.random.split(key, 3)
    return {
        "wq": scale * jax.random.normal(k0, (c_in, c_out), jnp.float32),        # enc_to_q
        "wkv": scale * jax.random.normal(k1, (c_in, 2 * c_out), jnp.float32),   # enc_to_kv (k|v)
        "wproj": scale * jax.random.normal(k2, (c_out, c_out), jnp.float32),    # enc_proj_to_embd
        "lnqk": jnp.ones((1, c_out), jnp.float32),                              # RMSNorm weight
    }


def _pick_num_blocks(n_groups):
    """1 grid step on single-TC chips (v5e/v6e); 2 TC-parallel blocks on 2-TC chips (v7x)."""
    try:
        kind = jax.devices()[0].device_kind.lower()
    except Exception:
        kind = ""
    if n_groups >= 2 and n_groups % 2 == 0 and "v7" in kind:
        return 2
    return 1


def perceiver_encoder_forward(x, params, n_head, latent_size,
                              local_csa_mem_tokens=None, mem_tokens=None,
                              num_blocks=None):
    """x: (B, ng, lg, Cin) -> (mem_tokens, local_csa_mem_tokens, y) with y (B, ng, ls, Cout)."""
    # TODO(synk): mem_tokens / local_csa_mem_tokens branch (extra enc_to_q projections) is not
    # exercised by this config (both None) and is not implemented.
    assert mem_tokens is None and local_csa_mem_tokens is None

    B, ng, lg, Cin = x.shape
    Cout = params["wq"].shape[1]
    ls = latent_size
    assert lg >= ls, "should have at least latent_size tokens per group"
    assert Cout % n_head == 0

    G = B * ng
    if num_blocks is None:
        num_blocks = _pick_num_blocks(G)
    assert G % num_blocks == 0
    gpb = G // num_blocks
    # NOTE: when B*ng grows, size gpb so gpb*lg approaches the MXU row tile
    # (~128 rows on v5e, ~256 on v6e/v7x) instead of always G / num_cores.

    mxu = jnp.bfloat16
    # Fused projection weight: columns = [ wq | wk | wv ] (wkv already stores k then v).
    w_all = jnp.concatenate([params["wq"], params["wkv"]], axis=1).astype(mxu)   # (Cin, 3*Cout)
    wproj = params["wproj"].astype(mxu)
    lnqk = params["lnqk"].astype(jnp.float32)

    # Pure view: pack gpb groups per grid step, group-major row order.
    x_flat = x.reshape(num_blocks, gpb * lg, Cin)

    kernel = make_perceiver_kernel(n_head, Cout, ls, lg, gpb, mxu_dtype=mxu)

    def full_spec(a):
        nd = a.ndim
        return pl.BlockSpec(a.shape, lambda b, _nd=nd: (0,) * _nd)

    out = pl.pallas_call(
        kernel,
        out_shape=jax.ShapeDtypeStruct((num_blocks, gpb * ls, Cout), jnp.float32),
        grid_spec=pltpu.PrefetchScalarGridSpec(
            num_scalar_prefetch=0,
            grid=(num_blocks,),
            in_specs=[
                pl.BlockSpec((None, gpb * lg, Cin), lambda b: (b, 0, 0)),   # all tokens
                full_spec(w_all), full_spec(lnqk), full_spec(wproj),
            ],
            out_specs=pl.BlockSpec((None, gpb * ls, Cout), lambda b: (b, 0, 0)),
        ),
        compiler_params=pltpu.CompilerParams(dimension_semantics=("parallel",)),
    )(x_flat, w_all, lnqk, wproj)

    y = out.reshape(B, ng, ls, Cout)   # pure view (row order matches group-major packing)
    return mem_tokens, local_csa_mem_tokens, y


if __name__ == "__main__":
    key = jax.random.PRNGKey(0)
    kx, kp = jax.random.split(key)

    B, ng, lg = 2, 2, 16          # batch, local groups, local group length
    Cin, Cout = 32, 64            # config.n_embd = [32, 64], idx_n_embd = 0
    n_head = 4
    latent_size = 8               # config.latent_size[0]

    x = jax.random.normal(kx, (B, ng, lg, Cin), jnp.float32)
    params = init_params(kp, Cin, Cout)

    mem_tokens, local_mem_tokens, y = perceiver_encoder_forward(
        x, params, n_head, latent_size)
    y = jax.block_until_ready(y)

    assert mem_tokens is None and local_mem_tokens is None
    assert y.shape == (B, ng, latent_size, Cout), y.shape
    assert bool(jnp.all(jnp.isfinite(y)))

    # Pure-JAX reference (f32) — loose tolerance because the kernel uses bf16 MXU operands.
    def reference(x, params):
        hd = Cout // n_head
        kv = jnp.einsum('bgtc,cd->bgtd', x, params["wkv"])
        k, v = kv[..., :Cout], kv[..., Cout:]
        q = jnp.einsum('bgtc,cd->bgtd', x[:, :, lg - latent_size:, :], params["wq"])

        def rms(t):
            return t * lax.rsqrt(jnp.mean(t * t, -1, keepdims=True) + RMS_EPS) * params["lnqk"][0]

        q, k = rms(q), rms(k)
        q = q.reshape(B, ng, latent_size, n_head, hd).transpose(0, 1, 3, 2, 4)
        k = k.reshape(B, ng, lg, n_head, hd).transpose(0, 1, 3, 2, 4)
        v = v.reshape(B, ng, lg, n_head, hd).transpose(0, 1, 3, 2, 4)
        s = jnp.einsum('bghqd,bghkd->bghqk', q, k) / math.sqrt(hd)
        keep = jnp.arange(lg)[None, :] <= jnp.arange(latent_size)[:, None] + (lg - latent_size)
        s = jnp.where(keep, s, -1e30)
        p = jax.nn.softmax(s, axis=-1)
        yy = jnp.einsum('bghqk,bghkd->bghqd', p, v)
        yy = yy.transpose(0, 1, 3, 2, 4).reshape(B, ng, latent_size, Cout)
        return jnp.einsum('bgld,de->bgle', yy, params["wproj"])

    y_ref = jax.block_until_ready(reference(x, params))
    max_err = float(jnp.max(jnp.abs(y - y_ref)))
    assert max_err < 5e-2, f"max abs error vs reference: {max_err}"

    print("KERNEL_OK")
</pallas_src>

<mosaic_0001>
module attributes {stable_mosaic.version = 11 : i64} {
  func.func @kernel(%arg0: i32, %arg1: memref<1x64x32xf32, #tpu.memory_space<vmem>>, %arg2: memref<32x192xbf16, #tpu.memory_space<vmem>>, %arg3: memref<1x64xf32, #tpu.memory_space<vmem>>, %arg4: memref<64x64xbf16, #tpu.memory_space<vmem>>, %arg5: memref<1x32x64xf32, #tpu.memory_space<vmem>>) attributes {dimension_semantics = [#tpu.dimension_semantics<parallel>], iteration_bounds = array<i64: 1>, scalar_prefetch = 0 : i64, scratch_operands = 0 : i64, tpu.core_type = #tpu.core_type<tc>, window_params = [{transform_indices = @transform_0, window_bounds = array<i64: 1, 64, 32>}, {pipeline_mode = #tpu.pipeline_mode<synchronous>, transform_indices = @transform_1, window_bounds = array<i64: 32, 192>}, {pipeline_mode = #tpu.pipeline_mode<synchronous>, transform_indices = @transform_2, window_bounds = array<i64: 1, 64>}, {pipeline_mode = #tpu.pipeline_mode<synchronous>, transform_indices = @transform_3, window_bounds = array<i64: 64, 64>}, {transform_indices = @transform_4, window_bounds = array<i64: 1, 32, 64>}]} {
    %c0 = arith.constant 0 : index
    %c0_0 = arith.constant 0 : index
    %c0_1 = arith.constant 0 : index
    %0 = vector.load %arg1[%c0, %c0_0, %c0_1] : memref<1x64x32xf32, #tpu.memory_space<vmem>>, vector<1x64x32xf32>
    %1 = vector.shape_cast %0 : vector<1x64x32xf32> to vector<64x32xf32>
    %2 = arith.truncf %1 : vector<64x32xf32> to vector<64x32xbf16>
    %c0_2 = arith.constant 0 : index
    %c0_3 = arith.constant 0 : index
    %3 = vector.load %arg2[%c0_2, %c0_3] : memref<32x192xbf16, #tpu.memory_space<vmem>>, vector<32x192xbf16>
    %cst = arith.constant dense<0.000000e+00> : vector<64x192xf32>
    %4 = tpu.matmul %2, %3, %cst {dimension_numbers = #tpu.dot_dimension_numbers<[1], [0], [0], [1], [0, 0, 1, 1], [], []>} : vector<64x32xbf16>, vector<32x192xbf16>, vector<64x192xf32> -> vector<64x192xf32>
    %5 = vector.extract_strided_slice %4 {offsets = [0, 0], sizes = [64, 64], strides = [1, 1]} : vector<64x192xf32> to vector<64x64xf32>
    %6 = vector.extract_strided_slice %4 {offsets = [0, 64], sizes = [64, 64], strides = [1, 1]} : vector<64x192xf32> to vector<64x64xf32>
    %7 = vector.extract_strided_slice %4 {offsets = [0, 128], sizes = [64, 64], strides = [1, 1]} : vector<64x192xf32> to vector<64x64xf32>
    %c0_4 = arith.constant 0 : index
    %c0_5 = arith.constant 0 : index
    %8 = vector.load %arg3[%c0_4, %c0_5] : memref<1x64xf32, #tpu.memory_space<vmem>>, vector<1x64xf32>
    %9 = vector.shape_cast %5 : vector<64x64xf32> to vector<4x16x64xf32>
    %10 = vector.extract_strided_slice %9 {offsets = [0, 8, 0], sizes = [4, 8, 64], strides = [1, 1, 1]} : vector<4x16x64xf32> to vector<4x8x64xf32>
    %11 = arith.mulf %10, %10 : vector<4x8x64xf32>
    %cst_6 = arith.constant dense<0.000000e+00> : vector<4x8xf32>
    %12 = vector.multi_reduction <add>, %11, %cst_6 [2] : vector<4x8x64xf32> to vector<4x8xf32>
    %13 = vector.shape_cast %12 : vector<4x8xf32> to vector<4x8x1xf32>
    %cst_7 = arith.constant 6.400000e+01 : f32
    %14 = vector.broadcast %cst_7 : f32 to vector<4x8x1xf32>
    %15 = arith.divf %13, %14 : vector<4x8x1xf32>
    %cst_8 = arith.constant 9.99999997E-7 : f32
    %16 = vector.broadcast %cst_8 : f32 to vector<4x8x1xf32>
    %17 = arith.addf %15, %16 : vector<4x8x1xf32>
    %18 = math.rsqrt %17 : vector<4x8x1xf32>
    %19 = vector.broadcast %18 : vector<4x8x1xf32> to vector<4x8x64xf32>
    %20 = arith.mulf %10, %19 : vector<4x8x64xf32>
    %21 = vector.shape_cast %8 : vector<1x64xf32> to vector<1x1x64xf32>
    %22 = vector.broadcast %21 : vector<1x1x64xf32> to vector<4x8x64xf32>
    %23 = arith.mulf %20, %22 : vector<4x8x64xf32>
    %cst_9 = arith.constant 2.500000e-01 : f32
    %24 = vector.broadcast %cst_9 : f32 to vector<4x8x64xf32>
    %25 = arith.mulf %23, %24 : vector<4x8x64xf32>
    %26 = arith.mulf %6, %6 : vector<64x64xf32>
    %cst_10 = arith.constant dense<0.000000e+00> : vector<64xf32>
    %27 = vector.multi_reduction <add>, %26, %cst_10 [1] : vector<64x64xf32> to vector<64xf32>
    %28 = vector.shape_cast %27 : vector<64xf32> to vector<64x1xf32>
    %cst_11 = arith.constant 6.400000e+01 : f32
    %29 = vector.broadcast %cst_11 : f32 to vector<64x1xf32>
    %30 = arith.divf %28, %29 : vector<64x1xf32>
    %cst_12 = arith.constant 9.99999997E-7 : f32
    %31 = vector.broadcast %cst_12 : f32 to vector<64x1xf32>
    %32 = arith.addf %30, %31 : vector<64x1xf32>
    %33 = math.rsqrt %32 : vector<64x1xf32>
    %34 = vector.broadcast %33 : vector<64x1xf32> to vector<64x64xf32>
    %35 = arith.mulf %6, %34 : vector<64x64xf32>
    %36 = vector.broadcast %8 : vector<1x64xf32> to vector<64x64xf32>
    %37 = arith.mulf %35, %36 : vector<64x64xf32>
    %38 = vector.shape_cast %37 : vector<64x64xf32> to vector<4x16x64xf32>
    %39 = vector.shape_cast %7 : vector<64x64xf32> to vector<4x16x64xf32>
    %40 = arith.truncf %25 : vector<4x8x64xf32> to vector<4x8x64xbf16>
    %41 = arith.truncf %38 : vector<4x16x64xf32> to vector<4x16x64xbf16>
    %42 = arith.truncf %39 : vector<4x16x64xf32> to vector<4x16x64xbf16>
    %c0_13 = arith.constant 0 : index
    %c0_14 = arith.constant 0 : index
    %43 = vector.load %arg4[%c0_13, %c0_14] : memref<64x64xbf16, #tpu.memory_space<vmem>>, vector<64x64xbf16>
    %44 = tpu.iota {dimensions = array<i32: 1>} : vector<1x8x16xi32>
    %45 = tpu.iota {dimensions = array<i32: 2>} : vector<1x8x16xi32>
    %c8_i32 = arith.constant 8 : i32
    %46 = vector.broadcast %c8_i32 : i32 to vector<1x8x16xi32>
    %47 = arith.addi %44, %46 : vector<1x8x16xi32>
    %48 = arith.cmpi sle, %45, %47 : vector<1x8x16xi32>
    %cst_15 = arith.constant 0.000000e+00 : f32
    %49 = vector.broadcast %cst_15 : f32 to vector<32x64xf32>
    %50 = vector.extract_strided_slice %40 {offsets = [0, 0, 0], sizes = [4, 8, 16], strides = [1, 1, 1]} : vector<4x8x64xbf16> to vector<4x8x16xbf16>
    %51 = vector.extract_strided_slice %41 {offsets = [0, 0, 0], sizes = [4, 16, 16], strides = [1, 1, 1]} : vector<4x16x64xbf16> to vector<4x16x16xbf16>
    "tpu.trace_start"() <{level = 10 : i32, message = "gqd,gkd->gqk"}> : () -> ()
    %cst_16 = arith.constant dense<0.000000e+00> : vector<4x8x16xf32>
    %52 = tpu.matmul %50, %51, %cst_16 {dimension_numbers = #tpu.dot_dimension_numbers<[2], [2], [1], [1], [0, 0, 0, 1, 1, 1], [0], [0]>} : vector<4x8x16xbf16>, vector<4x16x16xbf16>, vector<4x8x16xf32> -> vector<4x8x16xf32>
    %cst_17 = arith.constant -2.38197633E+38 : f32
    "tpu.trace_stop"() : () -> ()
    %53 = vector.shape_cast %48 : vector<1x8x16xi1> to vector<1x8x16xi1>
    %54 = vector.broadcast %53 : vector<1x8x16xi1> to vector<4x8x16xi1>
    %55 = vector.broadcast %cst_17 : f32 to vector<4x8x16xf32>
    %56 = arith.select %54, %52, %55 : vector<4x8x16xi1>, vector<4x8x16xf32>
    %cst_18 = arith.constant dense<0xFF800000> : vector<4x8xf32>
    %57 = vector.multi_reduction <maximumf>, %56, %cst_18 [2] : vector<4x8x16xf32> to vector<4x8xf32>
    %58 = vector.shape_cast %57 : vector<4x8xf32> to vector<4x8x1xf32>
    %59 = vector.broadcast %58 : vector<4x8x1xf32> to vector<4x8x16xf32>
    %60 = arith.subf %56, %59 : vector<4x8x16xf32>
    %61 = math.exp %60 : vector<4x8x16xf32>
    %cst_19 = arith.constant dense<0.000000e+00> : vector<4x8xf32>
    %62 = vector.multi_reduction <add>, %61, %cst_19 [2] : vector<4x8x16xf32> to vector<4x8xf32>
    %63 = vector.shape_cast %62 : vector<4x8xf32> to vector<4x8x1xf32>
    %64 = tpu.reciprocal %63 : vector<4x8x1xf32> -> vector<4x8x1xf32>
    %65 = vector.broadcast %64 : vector<4x8x1xf32> to vector<4x8x16xf32>
    %66 = arith.mulf %61, %65 : vector<4x8x16xf32>
    %67 = arith.truncf %66 : vector<4x8x16xf32> to vector<4x8x16xbf16>
    %68 = vector.extract_strided_slice %42 {offsets = [0, 0, 0], sizes = [4, 16, 16], strides = [1, 1, 1]} : vector<4x16x64xbf16> to vector<4x16x16xbf16>
    "tpu.trace_start"() <{level = 10 : i32, message = "gqk,gkd->gqd"}> : () -> ()
    %cst_20 = arith.constant dense<0.000000e+00> : vector<4x8x16xf32>
    %69 = tpu.matmul %67, %68, %cst_20 {dimension_numbers = #tpu.dot_dimension_numbers<[2], [1], [1], [2], [0, 0, 0, 1, 1, 2], [0], [0]>} : vector<4x8x16xbf16>, vector<4x16x16xbf16>, vector<4x8x16xf32> -> vector<4x8x16xf32>
    "tpu.trace_stop"() : () -> ()
    %70 = vector.shape_cast %69 : vector<4x8x16xf32> to vector<32x16xf32>
    %71 = arith.truncf %70 : vector<32x16xf32> to vector<32x16xbf16>
    %72 = vector.extract_strided_slice %43 {offsets = [0, 0], sizes = [16, 64], strides = [1, 1]} : vector<64x64xbf16> to vector<16x64xbf16>
    %cst_21 = arith.constant dense<0.000000e+00> : vector<32x64xf32>
    %73 = tpu.matmul %71, %72, %cst_21 {dimension_numbers = #tpu.dot_dimension_numbers<[1], [0], [0], [1], [0, 0, 1, 1], [], []>} : vector<32x16xbf16>, vector<16x64xbf16>, vector<32x64xf32> -> vector<32x64xf32>
    %74 = arith.addf %49, %73 : vector<32x64xf32>
    %75 = vector.extract_strided_slice %40 {offsets = [0, 0, 16], sizes = [4, 8, 16], strides = [1, 1, 1]} : vector<4x8x64xbf16> to vector<4x8x16xbf16>
    %76 = vector.extract_strided_slice %41 {offsets = [0, 0, 16], sizes = [4, 16, 16], strides = [1, 1, 1]} : vector<4x16x64xbf16> to vector<4x16x16xbf16>
    "tpu.trace_start"() <{level = 10 : i32, message = "gqd,gkd->gqk"}> : () -> ()
    %cst_22 = arith.constant dense<0.000000e+00> : vector<4x8x16xf32>
    %77 = tpu.matmul %75, %76, %cst_22 {dimension_numbers = #tpu.dot_dimension_numbers<[2], [2], [1], [1], [0, 0, 0, 1, 1, 1], [0], [0]>} : vector<4x8x16xbf16>, vector<4x16x16xbf16>, vector<4x8x16xf32> -> vector<4x8x16xf32>
    %cst_23 = arith.constant -2.38197633E+38 : f32
    "tpu.trace_stop"() : () -> ()
    %78 = vector.shape_cast %48 : vector<1x8x16xi1> to vector<1x8x16xi1>
    %79 = vector.broadcast %78 : vector<1x8x16xi1> to vector<4x8x16xi1>
    %80 = vector.broadcast %cst_23 : f32 to vector<4x8x16xf32>
    %81 = arith.select %79, %77, %80 : vector<4x8x16xi1>, vector<4x8x16xf32>
    %cst_24 = arith.constant dense<0xFF800000> : vector<4x8xf32>
    %82 = vector.multi_reduction <maximumf>, %81, %cst_24 [2] : vector<4x8x16xf32> to vector<4x8xf32>
    %83 = vector.shape_cast %82 : vector<4x8xf32> to vector<4x8x1xf32>
    %84 = vector.broadcast %83 : vector<4x8x1xf32> to vector<4x8x16xf32>
    %85 = arith.subf %81, %84 : vector<4x8x16xf32>
    %86 = math.exp %85 : vector<4x8x16xf32>
    %cst_25 = arith.constant dense<0.000000e+00> : vector<4x8xf32>
    %87 = vector.multi_reduction <add>, %86, %cst_25 [2] : vector<4x8x16xf32> to vector<4x8xf32>
    %88 = vector.shape_cast %87 : vector<4x8xf32> to vector<4x8x1xf32>
    %89 = tpu.reciprocal %88 : vector<4x8x1xf32> -> vector<4x8x1xf32>
    %90 = vector.broadcast %89 : vector<4x8x1xf32> to vector<4x8x16xf32>
    %91 = arith.mulf %86, %90 : vector<4x8x16xf32>
    %92 = arith.truncf %91 : vector<4x8x16xf32> to vector<4x8x16xbf16>
    %93 = vector.extract_strided_slice %42 {offsets = [0, 0, 16], sizes = [4, 16, 16], strides = [1, 1, 1]} : vector<4x16x64xbf16> to vector<4x16x16xbf16>
    "tpu.trace_start"() <{level = 10 : i32, message = "gqk,gkd->gqd"}> : () -> ()
    %cst_26 = arith.constant dense<0.000000e+00> : vector<4x8x16xf32>
    %94 = tpu.matmul %92, %93, %cst_26 {dimension_numbers = #tpu.dot_dimension_numbers<[2], [1], [1], [2], [0, 0, 0, 1, 1, 2], [0], [0]>} : vector<4x8x16xbf16>, vector<4x16x16xbf16>, vector<4x8x16xf32> -> vector<4x8x16xf32>
    "tpu.trace_stop"() : () -> ()
    %95 = vector.shape_cast %94 : vector<4x8x16xf32> to vector<32x16xf32>
    %96 = arith.truncf %95 : vector<32x16xf32> to vector<32x16xbf16>
    %97 = vector.extract_strided_slice %43 {offsets = [16, 0], sizes = [16, 64], strides = [1, 1]} : vector<64x64xbf16> to vector<16x64xbf16>
    %cst_27 = arith.constant dense<0.000000e+00> : vector<32x64xf32>
    %98 = tpu.matmul %96, %97, %cst_27 {dimension_numbers = #tpu.dot_dimension_numbers<[1], [0], [0], [1], [0, 0, 1, 1], [], []>} : vector<32x16xbf16>, vector<16x64xbf16>, vector<32x64xf32> -> vector<32x64xf32>
    %99 = arith.addf %74, %98 : vector<32x64xf32>
    %100 = vector.extract_strided_slice %40 {offsets = [0, 0, 32], sizes = [4, 8, 16], strides = [1, 1, 1]} : vector<4x8x64xbf16> to vector<4x8x16xbf16>
    %101 = vector.extract_strided_slice %41 {offsets = [0, 0, 32], sizes = [4, 16, 16], strides = [1, 1, 1]} : vector<4x16x64xbf16> to vector<4x16x16xbf16>
    "tpu.trace_start"() <{level = 10 : i32, message = "gqd,gkd->gqk"}> : () -> ()
    %cst_28 = arith.constant dense<0.000000e+00> : vector<4x8x16xf32>
    %102 = tpu.matmul %100, %101, %cst_28 {dimension_numbers = #tpu.dot_dimension_numbers<[2], [2], [1], [1], [0, 0, 0, 1, 1, 1], [0], [0]>} : vector<4x8x16xbf16>, vector<4x16x16xbf16>, vector<4x8x16xf32> -> vector<4x8x16xf32>
    %cst_29 = arith.constant -2.38197633E+38 : f32
    "tpu.trace_stop"() : () -> ()
    %103 = vector.shape_cast %48 : vector<1x8x16xi1> to vector<1x8x16xi1>
    %104 = vector.broadcast %103 : vector<1x8x16xi1> to vector<4x8x16xi1>
    %105 = vector.broadcast %cst_29 : f32 to vector<4x8x16xf32>
    %106 = arith.select %104, %102, %105 : vector<4x8x16xi1>, vector<4x8x16xf32>
    %cst_30 = arith.constant dense<0xFF800000> : vector<4x8xf32>
    %107 = vector.multi_reduction <maximumf>, %106, %cst_30 [2] : vector<4x8x16xf32> to vector<4x8xf32>
    %108 = vector.shape_cast %107 : vector<4x8xf32> to vector<4x8x1xf32>
    %109 = vector.broadcast %108 : vector<4x8x1xf32> to vector<4x8x16xf32>
    %110 = arith.subf %106, %109 : vector<4x8x16xf32>
    %111 = math.exp %110 : vector<4x8x16xf32>
    %cst_31 = arith.constant dense<0.000000e+00> : vector<4x8xf32>
    %112 = vector.multi_reduction <add>, %111, %cst_31 [2] : vector<4x8x16xf32> to vector<4x8xf32>
    %113 = vector.shape_cast %112 : vector<4x8xf32> to vector<4x8x1xf32>
    %114 = tpu.reciprocal %113 : vector<4x8x1xf32> -> vector<4x8x1xf32>
    %115 = vector.broadcast %114 : vector<4x8x1xf32> to vector<4x8x16xf32>
    %116 = arith.mulf %111, %115 : vector<4x8x16xf32>
    %117 = arith.truncf %116 : vector<4x8x16xf32> to vector<4x8x16xbf16>
    %118 = vector.extract_strided_slice %42 {offsets = [0, 0, 32], sizes = [4, 16, 16], strides = [1, 1, 1]} : vector<4x16x64xbf16> to vector<4x16x16xbf16>
    "tpu.trace_start"() <{level = 10 : i32, message = "gqk,gkd->gqd"}> : () -> ()
    %cst_32 = arith.constant dense<0.000000e+00> : vector<4x8x16xf32>
    %119 = tpu.matmul %117, %118, %cst_32 {dimension_numbers = #tpu.dot_dimension_numbers<[2], [1], [1], [2], [0, 0, 0, 1, 1, 2], [0], [0]>} : vector<4x8x16xbf16>, vector<4x16x16xbf16>, vector<4x8x16xf32> -> vector<4x8x16xf32>
    "tpu.trace_stop"() : () -> ()
    %120 = vector.shape_cast %119 : vector<4x8x16xf32> to vector<32x16xf32>
    %121 = arith.truncf %120 : vector<32x16xf32> to vector<32x16xbf16>
    %122 = vector.extract_strided_slice %43 {offsets = [32, 0], sizes = [16, 64], strides = [1, 1]} : vector<64x64xbf16> to vector<16x64xbf16>
    %cst_33 = arith.constant dense<0.000000e+00> : vector<32x64xf32>
    %123 = tpu.matmul %121, %122, %cst_33 {dimension_numbers = #tpu.dot_dimension_numbers<[1], [0], [0], [1], [0, 0, 1, 1], [], []>} : vector<32x16xbf16>, vector<16x64xbf16>, vector<32x64xf32> -> vector<32x64xf32>
    %124 = arith.addf %99, %123 : vector<32x64xf32>
    %125 = vector.extract_strided_slice %40 {offsets = [0, 0, 48], sizes = [4, 8, 16], strides = [1, 1, 1]} : vector<4x8x64xbf16> to vector<4x8x16xbf16>
    %126 = vector.extract_strided_slice %41 {offsets = [0, 0, 48], sizes = [4, 16, 16], strides = [1, 1, 1]} : vector<4x16x64xbf16> to vector<4x16x16xbf16>
    "tpu.trace_start"() <{level = 10 : i32, message = "gqd,gkd->gqk"}> : () -> ()
    %cst_34 = arith.constant dense<0.000000e+00> : vector<4x8x16xf32>
    %127 = tpu.matmul %125, %126, %cst_34 {dimension_numbers = #tpu.dot_dimension_numbers<[2], [2], [1], [1], [0, 0, 0, 1, 1, 1], [0], [0]>} : vector<4x8x16xbf16>, vector<4x16x16xbf16>, vector<4x8x16xf32> -> vector<4x8x16xf32>
    %cst_35 = arith.constant -2.38197633E+38 : f32
    "tpu.trace_stop"() : () -> ()
    %128 = vector.shape_cast %48 : vector<1x8x16xi1> to vector<1x8x16xi1>
    %129 = vector.broadcast %128 : vector<1x8x16xi1> to vector<4x8x16xi1>
    %130 = vector.broadcast %cst_35 : f32 to vector<4x8x16xf32>
    %131 = arith.select %129, %127, %130 : vector<4x8x16xi1>, vector<4x8x16xf32>
    %cst_36 = arith.constant dense<0xFF800000> : vector<4x8xf32>
    %132 = vector.multi_reduction <maximumf>, %131, %cst_36 [2] : vector<4x8x16xf32> to vector<4x8xf32>
    %133 = vector.shape_cast %132 : vector<4x8xf32> to vector<4x8x1xf32>
    %134 = vector.broadcast %133 : vector<4x8x1xf32> to vector<4x8x16xf32>
    %135 = arith.subf %131, %134 : vector<4x8x16xf32>
    %136 = math.exp %135 : vector<4x8x16xf32>
    %cst_37 = arith.constant dense<0.000000e+00> : vector<4x8xf32>
    %137 = vector.multi_reduction <add>, %136, %cst_37 [2] : vector<4x8x16xf32> to vector<4x8xf32>
    %138 = vector.shape_cast %137 : vector<4x8xf32> to vector<4x8x1xf32>
    %139 = tpu.reciprocal %138 : vector<4x8x1xf32> -> vector<4x8x1xf32>
    %140 = vector.broadcast %139 : vector<4x8x1xf32> to vector<4x8x16xf32>
    %141 = arith.mulf %136, %140 : vector<4x8x16xf32>
    %142 = arith.truncf %141 : vector<4x8x16xf32> to vector<4x8x16xbf16>
    %143 = vector.extract_strided_slice %42 {offsets = [0, 0, 48], sizes = [4, 16, 16], strides = [1, 1, 1]} : vector<4x16x64xbf16> to vector<4x16x16xbf16>
    "tpu.trace_start"() <{level = 10 : i32, message = "gqk,gkd->gqd"}> : () -> ()
    %cst_38 = arith.constant dense<0.000000e+00> : vector<4x8x16xf32>
    %144 = tpu.matmul %142, %143, %cst_38 {dimension_numbers = #tpu.dot_dimension_numbers<[2], [1], [1], [2], [0, 0, 0, 1, 1, 2], [0], [0]>} : vector<4x8x16xbf16>, vector<4x16x16xbf16>, vector<4x8x16xf32> -> vector<4x8x16xf32>
    "tpu.trace_stop"() : () -> ()
    %145 = vector.shape_cast %144 : vector<4x8x16xf32> to vector<32x16xf32>
    %146 = arith.truncf %145 : vector<32x16xf32> to vector<32x16xbf16>
    %147 = vector.extract_strided_slice %43 {offsets = [48, 0], sizes = [16, 64], strides = [1, 1]} : vector<64x64xbf16> to vector<16x64xbf16>
    %cst_39 = arith.constant dense<0.000000e+00> : vector<32x64xf32>
    %148 = tpu.matmul %146, %147, %cst_39 {dimension_numbers = #tpu.dot_dimension_numbers<[1], [0], [0], [1], [0, 0, 1, 1], [], []>} : vector<32x16xbf16>, vector<16x64xbf16>, vector<32x64xf32> -> vector<32x64xf32>
    %149 = arith.addf %124, %148 : vector<32x64xf32>
    %c0_40 = arith.constant 0 : index
    %c0_41 = arith.constant 0 : index
    %c0_42 = arith.constant 0 : index
    %150 = vector.load %arg5[%c0_40, %c0_41, %c0_42] : memref<1x32x64xf32, #tpu.memory_space<vmem>>, vector<1x32x64xf32>
    %151 = vector.shape_cast %150 : vector<1x32x64xf32> to vector<32x64xf32>
    %152 = vector.shape_cast %149 : vector<32x64xf32> to vector<1x32x64xf32>
    tpu.vector_store %arg5[%c0_40, %c0_41, %c0_42], %152 {strides = array<i32>} : memref<1x32x64xf32, #tpu.memory_space<vmem>>, vector<1x32x64xf32>,
    return
  }
  func.func @transform_0(%arg0: i32) -> (i32, i32, i32) {
    %c0_i32 = arith.constant 0 : i32
    %c0_i32_0 = arith.constant 0 : i32
    %c0_i32_1 = arith.constant 0 : i32
    return %arg0, %c0_i32, %c0_i32_0 : i32, i32, i32
  }
  func.func @transform_1(%arg0: i32) -> (i32, i32) {
    %c0_i32 = arith.constant 0 : i32
    %c0_i32_0 = arith.constant 0 : i32
    %c0_i32_1 = arith.constant 0 : i32
    return %c0_i32, %c0_i32_0 : i32, i32
  }
  func.func @transform_2(%arg0: i32) -> (i32, i32) {
    %c0_i32 = arith.constant 0 : i32
    %c0_i32_0 = arith.constant 0 : i32
    %c0_i32_1 = arith.constant 0 : i32
    return %c0_i32, %c0_i32_0 : i32, i32
  }
  func.func @transform_3(%arg0: i32) -> (i32, i32) {
    %c0_i32 = arith.constant 0 : i32
    %c0_i32_0 = arith.constant 0 : i32
    %c0_i32_1 = arith.constant 0 : i32
    return %c0_i32, %c0_i32_0 : i32, i32
  }
  func.func @transform_4(%arg0: i32) -> (i32, i32, i32) {
    %c0_i32 = arith.constant 0 : i32
    %c0_i32_0 = arith.constant 0 : i32
    %c0_i32_1 = arith.constant 0 : i32
    return %arg0, %c0_i32, %c0_i32_0 : i32, i32, i32
  }
}

</mosaic_0001>

<llo_original>
// kernel: tpu_custom_call.1
$region0: #{tpu_custom_call.1}
  #allocation0 [shape = 'u32[]', space=smem, size = 0x4, offset = 0x4, fixed_abs, tag = 'smem constant byte address 0x4 - core index']
  #allocation1 [shape = 'u32[144,128]{1,0:T(1,128)}', space=vmem, size = 0x12000, scoped, tag = 'internal scratch']
  %s0 = inlined_call_operand.vmem [shape: f32[1,64,32], index: 0, kind: input, shape index: {}]
  %s1 = inlined_call_operand.vmem [shape: bf16[32,192], index: 1, kind: input, shape index: {}]
  %s2 = inlined_call_operand.vmem [shape: f32[1,64], index: 2, kind: input, shape index: {}]
  %s3 = inlined_call_operand.vmem [shape: bf16[64,64], index: 3, kind: input, shape index: {}]
  %s4 = inlined_call_operand.hbm [shape: f32[1,32,64], index: 4, kind: output, shape index: {}]
  %s5 = sld [smem:[#allocation0]]
  $region26: #{tpu_custom_call.1} parent=0
    _
  %s7 = ssub.s32 1, %s5
  %s8 = scalar_select 0, %s7, %s5
  $region1: #{tpu_custom_call.1} parent=0
    #allocation2 [shape = 'u8[16384]{0}', space=vmem, size = 0x4000, scoped, tag = 'output window, operand 0, single buffered']
    #allocation3 [shape = 's32[1]{0}', space=sflag, size = 0x4, scoped, tag = 'scoped memory for tpu_custom_call.1']
    %9 = vsyncpa [#allocation3], 0
    // Predicated region
    $region2: #{tpu_custom_call.1} parent=1 // pred_check
      _
    $region3: #{tpu_custom_call.1} parent=1 // pred_check_branch
      %11 = sbr.rel (0) target = $region5
    $region4: #{tpu_custom_call.1} parent=1 // pred_region
      _
    $region5: #{tpu_custom_call.1} parent=1 // pred_fallthru
      _
    // Predicated region
    $region6: #{tpu_custom_call.1} parent=1 // pred_check
      _
    $region7: #{tpu_custom_call.1} parent=1 // pred_check_branch
      %13 = sbr.rel (0) target = $region9
    $region8: #{tpu_custom_call.1} parent=1 // pred_region
      _
    $region9: #{tpu_custom_call.1} parent=1 // pred_fallthru
      _
    // Predicated region
    $region10: #{tpu_custom_call.1} parent=1 // pred_check
      _
    $region11: #{tpu_custom_call.1} parent=1 // pred_check_branch
      %15 = sbr.rel (0) target = $region13
    $region12: #{tpu_custom_call.1} parent=1 // pred_region
      _
    $region13: #{tpu_custom_call.1} parent=1 // pred_fallthru
      _
    // Predicated region
    $region14: #{tpu_custom_call.1} parent=1 // pred_check
      _
    $region15: #{tpu_custom_call.1} parent=1 // pred_check_branch
      %17 = sbr.rel (0) target = $region17
    $region16: #{tpu_custom_call.1} parent=1 // pred_region
      _
    $region17: #{tpu_custom_call.1} parent=1 // pred_fallthru
      _
    %v19 = vld [vmem:[%s0] sm:$0xff]
    %v20 = vld [vmem:[%s0 + $0x8] sm:$0xff]
    %v21 = vld [vmem:[%s0 + $0x10] sm:$0xff]
    %v22 = vld [vmem:[%s0 + $0x18] sm:$0xff]
    %v23 = vld [vmem:[%s0 + $0x20] sm:$0xff]
    %v24 = vld [vmem:[%s0 + $0x28] sm:$0xff]
    %v25 = vld [vmem:[%s0 + $0x30] sm:$0xff]
    %v26 = vld [vmem:[%s0 + $0x38] sm:$0xff]
    %v27 = vpack.c.bf16 %v20, %v19
    %v28 = vpack.c.bf16 %v22, %v21
    %v29 = vpack.c.bf16 %v24, %v23
    %v30 = vpack.c.bf16 %v26, %v25
    %v31 = vld [vmem:[%s1] sm:$0xff]
    %v32 = vld [vmem:[%s1 + $0x8] sm:$0xff]
    %v33 = vld [vmem:[%s1 + $0x10] sm:$0xff]
    %v34 = vld [vmem:[%s1 + $0x18] sm:$0xff]
    %v39 = vunpack.c.l.b16 %v31
    %v40 = vunpack.c.h.b16 %v31
    %v41 = vunpack.c.l.b16 %v32
    %v42 = vunpack.c.h.b16 %v32
    %v43 = vunpack.c.l.b16 %v33
    %v44 = vunpack.c.h.b16 %v33
    %v45 = vunpack.c.l.b16 %v34
    %v46 = vunpack.c.h.b16 %v34
    %v47 = vpack.c.b16 %v41, %v39
    %v48 = vpack.c.b16 %v42, %v40
    %v49 = vpack.c.b16 %v45, %v43
    %v50 = vpack.c.b16 %v46, %v44
    %vm55 = vcmask 261120
    %v57 = vsel %vm55, %v27, 0
    %v60 = vsel %vm55, %v28, 0
    %v63 = vsel %vm55, %v29, 0
    %v66 = vsel %vm55, %v30, 0
    %68 = vmatprep.subr.bf16.mxu0 %v48
    %69 = vmatpush1.bf16.msra.mxu0 %v47
    %70 = vmatprep.subr.bf16.mxu0 %v50
    %71 = vmatpush1.bf16.msra.mxu0 %v49
    %72 = vmatprep.subr.bf16.mxu0 0
    %73 = vmatpush1.bf16.msra.mxu0 0
    %74 = vmatprep.subr.bf16.mxu0 0
    %75 = vmatpush1.bf16.msra.mxu0 0
    %76 = vmatprep.subr.bf16.mxu0 0
    %77 = vmatpush1.bf16.msra.mxu0 0
    %78 = vmatprep.subr.bf16.mxu0 0
    %79 = vmatpush1.bf16.msra.mxu0 0
    %80 = vmatprep.subr.bf16.mxu0 0
    %81 = vmatpush1.bf16.msra.mxu0 0
    %82 = vmatprep.subr.bf16.mxu0 0
    %83 = vmatpush1.bf16.msra.mxu0 0
    %84 = vmatprep.subr.bf16.mxu0 0
    %85 = vmatpush1.bf16.msra.mxu0 0
    %86 = vmatprep.subr.bf16.mxu0 0
    %87 = vmatpush1.bf16.msra.mxu0 0
    %88 = vmatprep.subr.bf16.mxu0 0
    %89 = vmatpush1.bf16.msra.mxu0 0
    %90 = vmatprep.subr.bf16.mxu0 0
    %91 = vmatpush1.bf16.msra.mxu0 0
    %92 = vmatprep.subr.bf16.mxu0 0
    %93 = vmatpush1.bf16.msra.mxu0 0
    %94 = vmatprep.subr.bf16.mxu0 0
    %95 = vmatpush1.bf16.msra.mxu0 0
    %96 = vmatprep.subr.bf16.mxu0 0
    %97 = vmatpush1.bf16.msra.mxu0 0
    %98 = vmatprep.subr.bf16.mxu0 0
    %99 = vmatpush1.bf16.msra.mxu0 0
    %100 = vmatprep.mubr.bf16.mxu0 0
    %101 = vmatmul.mubr.bf16.gmra.mrb[0].mxu0 %v57
    %v102 = vpop.f32.mrb[0].mxu0
    %v103 = vadd.f32 0.0, %v102
    %v104 = vpop.f32.mrb[0].mxu0
    %v105 = vadd.f32 0.0, %v104
    %v106 = vpop.f32.mrb[0].mxu0
    %v107 = vadd.f32 0.0, %v106
    %v108 = vpop.f32.mrb[0].mxu0
    %v109 = vadd.f32 0.0, %v108
    %110 = vmatprep.mubr.bf16.mxu0 0
    %111 = vmatmul.mubr.bf16.gmra.mrb[0].mxu0 %v60
    %v112 = vpop.f32.mrb[0].mxu0
    %v113 = vadd.f32 0.0, %v112
    %v114 = vpop.f32.mrb[0].mxu0
    %v115 = vadd.f32 0.0, %v114
    %v116 = vpop.f32.mrb[0].mxu0
    %v117 = vadd.f32 0.0, %v116
    %v118 = vpop.f32.mrb[0].mxu0
    %v119 = vadd.f32 0.0, %v118
    %120 = vmatprep.mubr.bf16.mxu0 0
    %121 = vmatmul.mubr.bf16.gmra.mrb[0].mxu0 %v63
    %v122 = vpop.f32.mrb[0].mxu0
    %v123 = vadd.f32 0.0, %v122
    %v124 = vpop.f32.mrb[0].mxu0
    %v125 = vadd.f32 0.0, %v124
    %v126 = vpop.f32.mrb[0].mxu0
    %v127 = vadd.f32 0.0, %v126
    %v128 = vpop.f32.mrb[0].mxu0
    %v129 = vadd.f32 0.0, %v128
    %130 = vmatprep.mubr.bf16.mxu0 0
    %131 = vmatmul.mubr.bf16.gmra.mrb[0].mxu0 %v66
    %v132 = vpop.f32.mrb[0].mxu0
    %v133 = vadd.f32 0.0, %v132
    %v134 = vpop.f32.mrb[0].mxu0
    %v135 = vadd.f32 0.0, %v134
    %v136 = vpop.f32.mrb[0].mxu0
    %v137 = vadd.f32 0.0, %v136
    %v138 = vpop.f32.mrb[0].mxu0
    %v139 = vadd.f32 0.0, %v138
    %140 = vdwg.mxu0
    %v141 = vld [vmem:[%s2] sm:$0x1]
    %v142 = vmul.f32 %v107, %v107
    %v143 = vmul.f32 %v117, %v117
    %v144 = vmul.f32 %v127, %v127
    %v145 = vmul.f32 %v137, %v137
    %vm146 = vcmask 523264
    %v147 = vsel %vm146, %v142, 0.0
    %148 = vadd.xlane.f32.xlu0 %v147
    %v149 = vpop.xlane.xlu0 %148
    %v150 = vsel %vm146, %v143, 0.0
    %151 = vadd.xlane.f32.xlu0 %v150
    %v152 = vpop.xlane.xlu0 %151
    %v153 = vsel %vm146, %v144, 0.0
    %154 = vadd.xlane.f32.xlu0 %v153
    %v155 = vpop.xlane.xlu0 %154
    %v156 = vsel %vm146, %v145, 0.0
    %157 = vadd.xlane.f32.xlu0 %v156
    %v158 = vpop.xlane.xlu0 %157
    %v159 = vrcp.pop 64.0
    %v160 = vmul.f32 %v149, %v159
    %v161 = vmul.f32 %v152, %v159
    %v162 = vmul.f32 %v155, %v159
    %v163 = vmul.f32 %v158, %v159
    %v164 = vadd.f32 %v160, 1e-06
    %v165 = vadd.f32 %v161, 1e-06
    %v166 = vadd.f32 %v162, 1e-06
    %v167 = vadd.f32 %v163, 1e-06
    %v168 = vrsqrt.pop %v164
    %v169 = vrsqrt.pop %v165
    %v170 = vrsqrt.pop %v166
    %v171 = vrsqrt.pop %v167
    %v172 = vmul.f32 %v107, %v168
    %v173 = vmul.f32 %v117, %v169
    %v174 = vmul.f32 %v127, %v170
    %v175 = vmul.f32 %v137, %v171
    %v177 = vlaneseq
    %v178 = vshrl.u32 %v177, 7
    %v179 = vsub.s32 0, %v178
    %v180 = vrot.slane %v141, %v179
    %v182 = vmul.f32 %v172, %v180
    %v183 = vmul.f32 %v173, %v180
    %v184 = vmul.f32 %v174, %v180
    %v185 = vmul.f32 %v175, %v180
    %v186 = vmul.f32 %v182, 0.25
    %v187 = vmul.f32 %v183, 0.25
    %v188 = vmul.f32 %v184, 0.25
    %v189 = vmul.f32 %v185, 0.25
    %v190 = vmul.f32 %v103, %v103
    %v191 = vmul.f32 %v113, %v113
    %v192 = vmul.f32 %v123, %v123
    %v193 = vmul.f32 %v133, %v133
    %202 = vrot.lane.b32.xlu0 %v190, 64
    %v203 = vpop.permute.xlu0 %202
    %204 = vrot.lane.b32.xlu0 %v142, 64
    %v205 = vpop.permute.xlu0 %204
    %206 = vrot.lane.b32.xlu0 %v191, 64
    %v207 = vpop.permute.xlu0 %206
    %208 = vrot.lane.b32.xlu0 %v143, 64
    %v209 = vpop.permute.xlu0 %208
    %210 = vrot.lane.b32.xlu0 %v192, 64
    %v211 = vpop.permute.xlu0 %210
    %212 = vrot.lane.b32.xlu0 %v144, 64
    %v213 = vpop.permute.xlu0 %212
    %214 = vrot.lane.b32.xlu0 %v193, 64
    %v215 = vpop.permute.xlu0 %214
    %216 = vrot.lane.b32.xlu0 %v145, 64
    %v217 = vpop.permute.xlu0 %216
    %v226 = vsel %vm146, %v203, 0.0
    %227 = vadd.xlane.f32.xlu0 %v226
    %v228 = vpop.xlane.xlu0 %227
    %v229 = vsel %vm146, %v205, 0.0
    %230 = vadd.xlane.f32.xlu0 %v229
    %v231 = vpop.xlane.xlu0 %230
    %v232 = vsel %vm146, %v207, 0.0
    %233 = vadd.xlane.f32.xlu0 %v232
    %v234 = vpop.xlane.xlu0 %233
    %v235 = vsel %vm146, %v209, 0.0
    %236 = vadd.xlane.f32.xlu0 %v235
    %v237 = vpop.xlane.xlu0 %236
    %v238 = vsel %vm146, %v211, 0.0
    %239 = vadd.xlane.f32.xlu0 %v238
    %v240 = vpop.xlane.xlu0 %239
    %v241 = vsel %vm146, %v213, 0.0
    %242 = vadd.xlane.f32.xlu0 %v241
    %v243 = vpop.xlane.xlu0 %242
    %v244 = vsel %vm146, %v215, 0.0
    %245 = vadd.xlane.f32.xlu0 %v244
    %v246 = vpop.xlane.xlu0 %245
    %v247 = vsel %vm146, %v217, 0.0
    %248 = vadd.xlane.f32.xlu0 %v247
    %v249 = vpop.xlane.xlu0 %248
    %v250 = vmul.f32 %v228, %v159
    %v251 = vmul.f32 %v231, %v159
    %v252 = vmul.f32 %v234, %v159
    %v253 = vmul.f32 %v237, %v159
    %v254 = vmul.f32 %v240, %v159
    %v255 = vmul.f32 %v243, %v159
    %v256 = vmul.f32 %v246, %v159
    %v257 = vmul.f32 %v249, %v159
    %v258 = vadd.f32 %v250, 1e-06
    %v259 = vadd.f32 %v251, 1e-06
    %v260 = vadd.f32 %v252, 1e-06
    %v261 = vadd.f32 %v253, 1e-06
    %v262 = vadd.f32 %v254, 1e-06
    %v263 = vadd.f32 %v255, 1e-06
    %v264 = vadd.f32 %v256, 1e-06
    %v265 = vadd.f32 %v257, 1e-06
    %v266 = vrsqrt.pop %v258
    %v267 = vrsqrt.pop %v259
    %v268 = vrsqrt.pop %v260
    %v269 = vrsqrt.pop %v261
    %v270 = vrsqrt.pop %v262
    %v271 = vrsqrt.pop %v263
    %v272 = vrsqrt.pop %v264
    %v273 = vrsqrt.pop %v265
    %v274 = vmul.f32 %v103, %v266
    %v275 = vmul.f32 %v107, %v267
    %v276 = vmul.f32 %v113, %v268
    %v277 = vmul.f32 %v117, %v269
    %v278 = vmul.f32 %v123, %v270
    %v279 = vmul.f32 %v127, %v271
    %v280 = vmul.f32 %v133, %v272
    %v281 = vmul.f32 %v137, %v273
    %282 = vrot.lane.b32.xlu0 %v180, 64
    %v283 = vpop.permute.xlu0 %282
    %v285 = vmul.f32 %v274, %v283
    %v286 = vmul.f32 %v275, %v283
    %v287 = vmul.f32 %v276, %v283
    %v288 = vmul.f32 %v277, %v283
    %v289 = vmul.f32 %v278, %v283
    %v290 = vmul.f32 %v279, %v283
    %v291 = vmul.f32 %v280, %v283
    %v292 = vmul.f32 %v281, %v283
    %v293 = vpack.c.bf16 %v186, %v186
    %v294 = vpack.c.bf16 %v187, %v187
    %v295 = vpack.c.bf16 %v188, %v188
    %v296 = vpack.c.bf16 %v189, %v189
    %v297 = vpack.c.bf16 %v286, %v285
    %v298 = vpack.c.bf16 %v288, %v287
    %v299 = vpack.c.bf16 %v290, %v289
    %v300 = vpack.c.bf16 %v292, %v291
    %v301 = vpack.c.bf16 %v109, %v105
    %v302 = vpack.c.bf16 %v119, %v115
    %v303 = vpack.c.bf16 %v129, %v125
    %v304 = vpack.c.bf16 %v139, %v135
    %v305 = vld [vmem:[%s3] sm:$0xf]
    %v306 = vld [vmem:[%s3 + $0x4] sm:$0xf]
    %v307 = vld [vmem:[%s3 + $0x8] sm:$0xf]
    %v308 = vld [vmem:[%s3 + $0xc] sm:$0xf]
    %v309 = vld [vmem:[%s3 + $0x10] sm:$0xf]
    %v310 = vld [vmem:[%s3 + $0x14] sm:$0xf]
    %v311 = vld [vmem:[%s3 + $0x18] sm:$0xf]
    %v312 = vld [vmem:[%s3 + $0x1c] sm:$0xf]
    %v313 = vlaneseq
    %v314 = vshrl.u32 %v313, 7
    %v315 = vlaneseq
    %v316 = vand.u32 %v315, 127
    %v317 = vadd.s32 %v314, 8
    %vm318 = vcmp.le.s32.totalorder %v316, %v317
    %320 = vrot.lane.b32.xlu0 %v297, 64
    %v321 = vpop.permute.xlu0 %320
    %vm322 = vcmask 130048
    %v324 = vsel %vm322, %v293, 0
    %v327 = vsel %vm322, %v321, 0
    %329 = vmatprep.subr.bf16.mxu0 0
    %330 = vmatpush1.bf16.xpose.msra.mxu0 %v327
    %331 = vmatprep.subr.bf16.mxu0 0
    %332 = vmatpush1.bf16.xpose.msra.mxu0 0
    %333 = vmatprep.subr.bf16.mxu0 0
    %334 = vmatpush1.bf16.xpose.msra.mxu0 0
    %335 = vmatprep.subr.bf16.mxu0 0
    %336 = vmatpush1.bf16.xpose.msra.mxu0 0
    %337 = vmatprep.subr.bf16.mxu0 0
    %338 = vmatpush1.bf16.xpose.msra.mxu0 0
    %339 = vmatprep.subr.bf16.mxu0 0
    %340 = vmatpush1.bf16.xpose.msra.mxu0 0
    %341 = vmatprep.subr.bf16.mxu0 0
    %342 = vmatpush1.bf16.xpose.msra.mxu0 0
    %343 = vmatprep.subr.bf16.mxu0 0
    %344 = vmatpush1.bf16.xpose.msra.mxu0 0
    %345 = vmatprep.subr.bf16.mxu0 0
    %346 = vmatpush1.bf16.xpose.msra.mxu0 0
    %347 = vmatprep.subr.bf16.mxu0 0
    %348 = vmatpush1.bf16.xpose.msra.mxu0 0
    %349 = vmatprep.subr.bf16.mxu0 0
    %350 = vmatpush1.bf16.xpose.msra.mxu0 0
    %351 = vmatprep.subr.bf16.mxu0 0
    %352 = vmatpush1.bf16.xpose.msra.mxu0 0
    %353 = vmatprep.subr.bf16.mxu0 0
    %354 = vmatpush1.bf16.xpose.msra.mxu0 0
    %355 = vmatprep.subr.bf16.mxu0 0
    %356 = vmatpush1.bf16.xpose.msra.mxu0 0
    %357 = vmatprep.subr.bf16.mxu0 0
    %358 = vmatpush1.bf16.xpose.msra.mxu0 0
    %359 = vmatprep.subr.bf16.mxu0 0
    %360 = vmatpush1.bf16.xpose.msra.mxu0 0
    %361 = vmatprep.mubr.bf16.mxu0 0
    %362 = vmatmul.mubr.bf16.gmra.mrb[0].mxu0 %v324
    %v363 = vpop.f32.mrb[0].mxu0
    %v364 = vadd.f32 0.0, %v363
    %v365 = vpop.f32.mrb[0].mxu0
    %v366 = vpop.f32.mrb[0].mxu0
    %v367 = vpop.f32.mrb[0].mxu0
    %368 = vdwg.mxu0
    %370 = vrot.lane.b32.xlu0 %v298, 64
    %v371 = vpop.permute.xlu0 %370
    %v373 = vsel %vm322, %v294, 0
    %v376 = vsel %vm322, %v371, 0
    %378 = vmatprep.subr.bf16.mxu0 0
    %379 = vmatpush1.bf16.xpose.msra.mxu0 %v376
    %380 = vmatprep.subr.bf16.mxu0 0
    %381 = vmatpush1.bf16.xpose.msra.mxu0 0
    %382 = vmatprep.subr.bf16.mxu0 0
    %383 = vmatpush1.bf16.xpose.msra.mxu0 0
    %384 = vmatprep.subr.bf16.mxu0 0
    %385 = vmatpush1.bf16.xpose.msra.mxu0 0
    %386 = vmatprep.subr.bf16.mxu0 0
    %387 = vmatpush1.bf16.xpose.msra.mxu0 0
    %388 = vmatprep.subr.bf16.mxu0 0
    %389 = vmatpush1.bf16.xpose.msra.mxu0 0
    %390 = vmatprep.subr.bf16.mxu0 0
    %391 = vmatpush1.bf16.xpose.msra.mxu0 0
    %392 = vmatprep.subr.bf16.mxu0 0
    %393 = vmatpush1.bf16.xpose.msra.mxu0 0
    %394 = vmatprep.subr.bf16.mxu0 0
    %395 = vmatpush1.bf16.xpose.msra.mxu0 0
    %396 = vmatprep.subr.bf16.mxu0 0
    %397 = vmatpush1.bf16.xpose.msra.mxu0 0
    %398 = vmatprep.subr.bf16.mxu0 0
    %399 = vmatpush1.bf16.xpose.msra.mxu0 0
    %400 = vmatprep.subr.bf16.mxu0 0
    %401 = vmatpush1.bf16.xpose.msra.mxu0 0
    %402 = vmatprep.subr.bf16.mxu0 0
    %403 = vmatpush1.bf16.xpose.msra.mxu0 0
    %404 = vmatprep.subr.bf16.mxu0 0
    %405 = vmatpush1.bf16.xpose.msra.mxu0 0
    %406 = vmatprep.subr.bf16.mxu0 0
    %407 = vmatpush1.bf16.xpose.msra.mxu0 0
    %408 = vmatprep.subr.bf16.mxu0 0
    %409 = vmatpush1.bf16.xpose.msra.mxu0 0
    %410 = vmatprep.mubr.bf16.mxu0 0
    %411 = vmatmul.mubr.bf16.gmra.mrb[0].mxu0 %v373
    %v412 = vpop.f32.mrb[0].mxu0
    %v413 = vadd.f32 0.0, %v412
    %v414 = vpop.f32.mrb[0].mxu0
    %v415 = vpop.f32.mrb[0].mxu0
    %v416 = vpop.f32.mrb[0].mxu0
    %417 = vdwg.mxu0
    %419 = vrot.lane.b32.xlu0 %v299, 64
    %v420 = vpop.permute.xlu0 %419
    %v422 = vsel %vm322, %v295, 0
    %v425 = vsel %vm322, %v420, 0
    %427 = vmatprep.subr.bf16.mxu0 0
    %428 = vmatpush1.bf16.xpose.msra.mxu0 %v425
    %429 = vmatprep.subr.bf16.mxu0 0
    %430 = vmatpush1.bf16.xpose.msra.mxu0 0
    %431 = vmatprep.subr.bf16.mxu0 0
    %432 = vmatpush1.bf16.xpose.msra.mxu0 0
    %433 = vmatprep.subr.bf16.mxu0 0
    %434 = vmatpush1.bf16.xpose.msra.mxu0 0
    %435 = vmatprep.subr.bf16.mxu0 0
    %436 = vmatpush1.bf16.xpose.msra.mxu0 0
    %437 = vmatprep.subr.bf16.mxu0 0
    %438 = vmatpush1.bf16.xpose.msra.mxu0 0
    %439 = vmatprep.subr.bf16.mxu0 0
    %440 = vmatpush1.bf16.xpose.msra.mxu0 0
    %441 = vmatprep.subr.bf16.mxu0 0
    %442 = vmatpush1.bf16.xpose.msra.mxu0 0
    %443 = vmatprep.subr.bf16.mxu0 0
    %444 = vmatpush1.bf16.xpose.msra.mxu0 0
    %445 = vmatprep.subr.bf16.mxu0 0
    %446 = vmatpush1.bf16.xpose.msra.mxu0 0
    %447 = vmatprep.subr.bf16.mxu0 0
    %448 = vmatpush1.bf16.xpose.msra.mxu0 0
    %449 = vmatprep.subr.bf16.mxu0 0
    %450 = vmatpush1.bf16.xpose.msra.mxu0 0
    %451 = vmatprep.subr.bf16.mxu0 0
    %452 = vmatpush1.bf16.xpose.msra.mxu0 0
    %453 = vmatprep.subr.bf16.mxu0 0
    %454 = vmatpush1.bf16.xpose.msra.mxu0 0
    %455 = vmatprep.subr.bf16.mxu0 0
    %456 = vmatpush1.bf16.xpose.msra.mxu0 0
    %457 = vmatprep.subr.bf16.mxu0 0
    %458 = vmatpush1.bf16.xpose.msra.mxu0 0
    %459 = vmatprep.mubr.bf16.mxu0 0
    %460 = vmatmul.mubr.bf16.gmra.mrb[0].mxu0 %v422
    %v461 = vpop.f32.mrb[0].mxu0
    %v462 = vadd.f32 0.0, %v461
    %v463 = vpop.f32.mrb[0].mxu0
    %v464 = vpop.f32.mrb[0].mxu0
    %v465 = vpop.f32.mrb[0].mxu0
    %466 = vdwg.mxu0
    %468 = vrot.lane.b32.xlu0 %v300, 64
    %v469 = vpop.permute.xlu0 %468
    %v471 = vsel %vm322, %v296, 0
    %v474 = vsel %vm322, %v469, 0
    %476 = vmatprep.subr.bf16.mxu0 0
    %477 = vmatpush1.bf16.xpose.msra.mxu0 %v474
    %478 = vmatprep.subr.bf16.mxu0 0
    %479 = vmatpush1.bf16.xpose.msra.mxu0 0
    %480 = vmatprep.subr.bf16.mxu0 0
    %481 = vmatpush1.bf16.xpose.msra.mxu0 0
    %482 = vmatprep.subr.bf16.mxu0 0
    %483 = vmatpush1.bf16.xpose.msra.mxu0 0
    %484 = vmatprep.subr.bf16.mxu0 0
    %485 = vmatpush1.bf16.xpose.msra.mxu0 0
    %486 = vmatprep.subr.bf16.mxu0 0
    %487 = vmatpush1.bf16.xpose.msra.mxu0 0
    %488 = vmatprep.subr.bf16.mxu0 0
    %489 = vmatpush1.bf16.xpose.msra.mxu0 0
    %490 = vmatprep.subr.bf16.mxu0 0
    %491 = vmatpush1.bf16.xpose.msra.mxu0 0
    %492 = vmatprep.subr.bf16.mxu0 0
    %493 = vmatpush1.bf16.xpose.msra.mxu0 0
    %494 = vmatprep.subr.bf16.mxu0 0
    %495 = vmatpush1.bf16.xpose.msra.mxu0 0
    %496 = vmatprep.subr.bf16.mxu0 0
    %497 = vmatpush1.bf16.xpose.msra.mxu0 0
    %498 = vmatprep.subr.bf16.mxu0 0
    %499 = vmatpush1.bf16.xpose.msra.mxu0 0
    %500 = vmatprep.subr.bf16.mxu0 0
    %501 = vmatpush1.bf16.xpose.msra.mxu0 0
    %502 = vmatprep.subr.bf16.mxu0 0
    %503 = vmatpush1.bf16.xpose.msra.mxu0 0
    %504 = vmatprep.subr.bf16.mxu0 0
    %505 = vmatpush1.bf16.xpose.msra.mxu0 0
    %506 = vmatprep.subr.bf16.mxu0 0
    %507 = vmatpush1.bf16.xpose.msra.mxu0 0
    %508 = vmatprep.mubr.bf16.mxu0 0
    %509 = vmatmul.mubr.bf16.gmra.mrb[0].mxu0 %v471
    %v510 = vpop.f32.mrb[0].mxu0
    %v511 = vadd.f32 0.0, %v510
    %v512 = vpop.f32.mrb[0].mxu0
    %v513 = vpop.f32.mrb[0].mxu0
    %v514 = vpop.f32.mrb[0].mxu0
    %515 = vdwg.mxu0
    %v516 = vsel %vm318, 1, 0
    %vm517 = vcmp.eq.s32.totalorder %v516, 1
    %v518 = vsel %vm517, %v364, -2.3819763e+38
    %v519 = vsel %vm517, %v413, -2.3819763e+38
    %v520 = vsel %vm517, %v462, -2.3819763e+38
    %v521 = vsel %vm517, %v511, -2.3819763e+38
    %v522 = vsel %vm322, %v518, -inf
    %523 = vmax.xlane.f32.xlu0 %v522
    %v524 = vpop.xlane.xlu0 %523
    %v525 = vsel %vm322, %v519, -inf
    %526 = vmax.xlane.f32.xlu0 %v525
    %v527 = vpop.xlane.xlu0 %526
    %v528 = vsel %vm322, %v520, -inf
    %529 = vmax.xlane.f32.xlu0 %v528
    %v530 = vpop.xlane.xlu0 %529
    %v531 = vsel %vm322, %v521, -inf
    %532 = vmax.xlane.f32.xlu0 %v531
    %v533 = vpop.xlane.xlu0 %532
    %v534 = vsub.f32 %v518, %v524
    %v535 = vsub.f32 %v519, %v527
    %v536 = vsub.f32 %v520, %v530
    %v537 = vsub.f32 %v521, %v533
    %v538 = vmul.f32 %v534, 1.442695
    %v539 = vpow.pop %v538
    %v540 = vmul.f32 %v535, 1.442695
    %v541 = vpow.pop %v540
    %v542 = vmul.f32 %v536, 1.442695
    %v543 = vpow.pop %v542
    %v544 = vmul.f32 %v537, 1.442695
    %v545 = vpow.pop %v544
    %v546 = vsel %vm322, %v539, 0.0
    %547 = vadd.xlane.f32.xlu0 %v546
    %v548 = vpop.xlane.xlu0 %547
    %v549 = vsel %vm322, %v541, 0.0
    %550 = vadd.xlane.f32.xlu0 %v549
    %v551 = vpop.xlane.xlu0 %550
    %v552 = vsel %vm322, %v543, 0.0
    %553 = vadd.xlane.f32.xlu0 %v552
    %v554 = vpop.xlane.xlu0 %553
    %v555 = vsel %vm322, %v545, 0.0
    %556 = vadd.xlane.f32.xlu0 %v555
    %v557 = vpop.xlane.xlu0 %556
    %v558 = vrcp.pop %v548
    %v559 = vrcp.pop %v551
    %v560 = vrcp.pop %v554
    %v561 = vrcp.pop %v557
    %v562 = vmul.f32 %v539, %v558
    %v563 = vmul.f32 %v541, %v559
    %v564 = vmul.f32 %v543, %v560
    %v565 = vmul.f32 %v545, %v561
    %v566 = vpack.c.bf16 %v562, %v562
    %v567 = vpack.c.bf16 %v563, %v563
    %v568 = vpack.c.bf16 %v564, %v564
    %v569 = vpack.c.bf16 %v565, %v565
    %v571 = vsel %vm322, %v566, 0
    %573 = vmatprep.subr.bf16.mxu0 0
    %574 = vmatpush1.bf16.msra.mxu0 %v301
    %575 = vmatprep.subr.bf16.mxu0 0
    %576 = vmatpush1.bf16.msra.mxu0 0
    %577 = vmatprep.subr.bf16.mxu0 0
    %578 = vmatpush1.bf16.msra.mxu0 0
    %579 = vmatprep.subr.bf16.mxu0 0
    %580 = vmatpush1.bf16.msra.mxu0 0
    %581 = vmatprep.subr.bf16.mxu0 0
    %582 = vmatpush1.bf16.msra.mxu0 0
    %583 = vmatprep.subr.bf16.mxu0 0
    %584 = vmatpush1.bf16.msra.mxu0 0
    %585 = vmatprep.subr.bf16.mxu0 0
    %586 = vmatpush1.bf16.msra.mxu0 0
    %587 = vmatprep.subr.bf16.mxu0 0
    %588 = vmatpush1.bf16.msra.mxu0 0
    %589 = vmatprep.subr.bf16.mxu0 0
    %590 = vmatpush1.bf16.msra.mxu0 0
    %591 = vmatprep.subr.bf16.mxu0 0
    %592 = vmatpush1.bf16.msra.mxu0 0
    %593 = vmatprep.subr.bf16.mxu0 0
    %594 = vmatpush1.bf16.msra.mxu0 0
    %595 = vmatprep.subr.bf16.mxu0 0
    %596 = vmatpush1.bf16.msra.mxu0 0
    %597 = vmatprep.subr.bf16.mxu0 0
    %598 = vmatpush1.bf16.msra.mxu0 0
    %599 = vmatprep.subr.bf16.mxu0 0
    %600 = vmatpush1.bf16.msra.mxu0 0
    %601 = vmatprep.subr.bf16.mxu0 0
    %602 = vmatpush1.bf16.msra.mxu0 0
    %603 = vmatprep.subr.bf16.mxu0 0
    %604 = vmatpush1.bf16.msra.mxu0 0
    %605 = vmatprep.mubr.bf16.mxu0 0
    %606 = vmatmul.mubr.bf16.gmra.mrb[0].mxu0 %v571
    %v607 = vpop.f32.mrb[0].mxu0
    %v608 = vadd.f32 0.0, %v607
    %v609 = vpop.f32.mrb[0].mxu0
    %v610 = vpop.f32.mrb[0].mxu0
    %v611 = vpop.f32.mrb[0].mxu0
    %612 = vdwg.mxu0
    %v614 = vsel %vm322, %v567, 0
    %616 = vmatprep.subr.bf16.mxu0 0
    %617 = vmatpush1.bf16.msra.mxu0 %v302
    %618 = vmatprep.subr.bf16.mxu0 0
    %619 = vmatpush1.bf16.msra.mxu0 0
    %620 = vmatprep.subr.bf16.mxu0 0
    %621 = vmatpush1.bf16.msra.mxu0 0
    %622 = vmatprep.subr.bf16.mxu0 0
    %623 = vmatpush1.bf16.msra.mxu0 0
    %624 = vmatprep.subr.bf16.mxu0 0
    %625 = vmatpush1.bf16.msra.mxu0 0
    %626 = vmatprep.subr.bf16.mxu0 0
    %627 = vmatpush1.bf16.msra.mxu0 0
    %628 = vmatprep.subr.bf16.mxu0 0
    %629 = vmatpush1.bf16.msra.mxu0 0
    %630 = vmatprep.subr.bf16.mxu0 0
    %631 = vmatpush1.bf16.msra.mxu0 0
    %632 = vmatprep.subr.bf16.mxu0 0
    %633 = vmatpush1.bf16.msra.mxu0 0
    %634 = vmatprep.subr.bf16.mxu0 0
    %635 = vmatpush1.bf16.msra.mxu0 0
    %636 = vmatprep.subr.bf16.mxu0 0
    %637 = vmatpush1.bf16.msra.mxu0 0
    %638 = vmatprep.subr.bf16.mxu0 0
    %639 = vmatpush1.bf16.msra.mxu0 0
    %640 = vmatprep.subr.bf16.mxu0 0
    %641 = vmatpush1.bf16.msra.mxu0 0
    %642 = vmatprep.subr.bf16.mxu0 0
    %643 = vmatpush1.bf16.msra.mxu0 0
    %644 = vmatprep.subr.bf16.mxu0 0
    %645 = vmatpush1.bf16.msra.mxu0 0
    %646 = vmatprep.subr.bf16.mxu0 0
    %647 = vmatpush1.bf16.msra.mxu0 0
    %648 = vmatprep.mubr.bf16.mxu0 0
    %649 = vmatmul.mubr.bf16.gmra.mrb[0].mxu0 %v614
    %v650 = vpop.f32.mrb[0].mxu0
    %v651 = vadd.f32 0.0, %v650
    %v652 = vpop.f32.mrb[0].mxu0
    %v653 = vpop.f32.mrb[0].mxu0
    %v654 = vpop.f32.mrb[0].mxu0
    %655 = vdwg.mxu0
    %v657 = vsel %vm322, %v568, 0
    %659 = vmatprep.subr.bf16.mxu0 0
    %660 = vmatpush1.bf16.msra.mxu0 %v303
    %661 = vmatprep.subr.bf16.mxu0 0
    %662 = vmatpush1.bf16.msra.mxu0 0
    %663 = vmatprep.subr.bf16.mxu0 0
    %664 = vmatpush1.bf16.msra.mxu0 0
    %665 = vmatprep.subr.bf16.mxu0 0
    %666 = vmatpush1.bf16.msra.mxu0 0
    %667 = vmatprep.subr.bf16.mxu0 0
    %668 = vmatpush1.bf16.msra.mxu0 0
    %669 = vmatprep.subr.bf16.mxu0 0
    %670 = vmatpush1.bf16.msra.mxu0 0
    %671 = vmatprep.subr.bf16.mxu0 0
    %672 = vmatpush1.bf16.msra.mxu0 0
    %673 = vmatprep.subr.bf16.mxu0 0
    %674 = vmatpush1.bf16.msra.mxu0 0
    %675 = vmatprep.subr.bf16.mxu0 0
    %676 = vmatpush1.bf16.msra.mxu0 0
    %677 = vmatprep.subr.bf16.mxu0 0
    %678 = vmatpush1.bf16.msra.mxu0 0
    %679 = vmatprep.subr.bf16.mxu0 0
    %680 = vmatpush1.bf16.msra.mxu0 0
    %681 = vmatprep.subr.bf16.mxu0 0
    %682 = vmatpush1.bf16.msra.mxu0 0
    %683 = vmatprep.subr.bf16.mxu0 0
    %684 = vmatpush1.bf16.msra.mxu0 0
    %685 = vmatprep.subr.bf16.mxu0 0
    %686 = vmatpush1.bf16.msra.mxu0 0
    %687 = vmatprep.subr.bf16.mxu0 0
    %688 = vmatpush1.bf16.msra.mxu0 0
    %689 = vmatprep.subr.bf16.mxu0 0
    %690 = vmatpush1.bf16.msra.mxu0 0
    %691 = vmatprep.mubr.bf16.mxu0 0
    %692 = vmatmul.mubr.bf16.gmra.mrb[0].mxu0 %v657
    %v693 = vpop.f32.mrb[0].mxu0
    %v694 = vadd.f32 0.0, %v693
    %v695 = vpop.f32.mrb[0].mxu0
    %v696 = vpop.f32.mrb[0].mxu0
    %v697 = vpop.f32.mrb[0].mxu0
    %698 = vdwg.mxu0
    %v700 = vsel %vm322, %v569, 0
    %702 = vmatprep.subr.bf16.mxu0 0
    %703 = vmatpush1.bf16.msra.mxu0 %v304
    %704 = vmatprep.subr.bf16.mxu0 0
    %705 = vmatpush1.bf16.msra.mxu0 0
    %706 = vmatprep.subr.bf16.mxu0 0
    %707 = vmatpush1.bf16.msra.mxu0 0
    %708 = vmatprep.subr.bf16.mxu0 0
    %709 = vmatpush1.bf16.msra.mxu0 0
    %710 = vmatprep.subr.bf16.mxu0 0
    %711 = vmatpush1.bf16.msra.mxu0 0
    %712 = vmatprep.subr.bf16.mxu0 0
    %713 = vmatpush1.bf16.msra.mxu0 0
    %714 = vmatprep.subr.bf16.mxu0 0
    %715 = vmatpush1.bf16.msra.mxu0 0
    %716 = vmatprep.subr.bf16.mxu0 0
    %717 = vmatpush1.bf16.msra.mxu0 0
    %718 = vmatprep.subr.bf16.mxu0 0
    %719 = vmatpush1.bf16.msra.mxu0 0
    %720 = vmatprep.subr.bf16.mxu0 0
    %721 = vmatpush1.bf16.msra.mxu0 0
    %722 = vmatprep.subr.bf16.mxu0 0
    %723 = vmatpush1.bf16.msra.mxu0 0
    %724 = vmatprep.subr.bf16.mxu0 0
    %725 = vmatpush1.bf16.msra.mxu0 0
    %726 = vmatprep.subr.bf16.mxu0 0
    %727 = vmatpush1.bf16.msra.mxu0 0
    %728 = vmatprep.subr.bf16.mxu0 0
    %729 = vmatpush1.bf16.msra.mxu0 0
    %730 = vmatprep.subr.bf16.mxu0 0
    %731 = vmatpush1.bf16.msra.mxu0 0
    %732 = vmatprep.subr.bf16.mxu0 0
    %733 = vmatpush1.bf16.msra.mxu0 0
    %734 = vmatprep.mubr.bf16.mxu0 0
    %735 = vmatmul.mubr.bf16.gmra.mrb[0].mxu0 %v700
    %v736 = vpop.f32.mrb[0].mxu0
    %v737 = vadd.f32 0.0, %v736
    %v738 = vpop.f32.mrb[0].mxu0
    %v739 = vpop.f32.mrb[0].mxu0
    %v740 = vpop.f32.mrb[0].mxu0
    %741 = vdwg.mxu0
    %v742 = vpack.c.bf16 %v651, %v608
    %v743 = vpack.c.bf16 %v737, %v694
    %745 = vrot.lane.b32.xlu0 %v293, 112
    %v746 = vpop.permute.xlu0 %745
    %747 = vrot.lane.b32.xlu0 %v297, 48
    %v748 = vpop.permute.xlu0 %747
    %v750 = vsel %vm322, %v746, 0
    %v753 = vsel %vm322, %v748, 0
    %755 = vmatprep.subr.bf16.mxu0 0
    %756 = vmatpush1.bf16.xpose.msra.mxu0 %v753
    %757 = vmatprep.subr.bf16.mxu0 0
    %758 = vmatpush1.bf16.xpose.msra.mxu0 0
    %759 = vmatprep.subr.bf16.mxu0 0
    %760 = vmatpush1.bf16.xpose.msra.mxu0 0
    %761 = vmatprep.subr.bf16.mxu0 0
    %762 = vmatpush1.bf16.xpose.msra.mxu0 0
    %763 = vmatprep.subr.bf16.mxu0 0
    %764 = vmatpush1.bf16.xpose.msra.mxu0 0
    %765 = vmatprep.subr.bf16.mxu0 0
    %766 = vmatpush1.bf16.xpose.msra.mxu0 0
    %767 = vmatprep.subr.bf16.mxu0 0
    %768 = vmatpush1.bf16.xpose.msra.mxu0 0
    %769 = vmatprep.subr.bf16.mxu0 0
    %770 = vmatpush1.bf16.xpose.msra.mxu0 0
    %771 = vmatprep.subr.bf16.mxu0 0
    %772 = vmatpush1.bf16.xpose.msra.mxu0 0
    %773 = vmatprep.subr.bf16.mxu0 0
    %774 = vmatpush1.bf16.xpose.msra.mxu0 0
    %775 = vmatprep.subr.bf16.mxu0 0
    %776 = vmatpush1.bf16.xpose.msra.mxu0 0
    %777 = vmatprep.subr.bf16.mxu0 0
    %778 = vmatpush1.bf16.xpose.msra.mxu0 0
    %779 = vmatprep.subr.bf16.mxu0 0
    %780 = vmatpush1.bf16.xpose.msra.mxu0 0
    %781 = vmatprep.subr.bf16.mxu0 0
    %782 = vmatpush1.bf16.xpose.msra.mxu0 0
    %783 = vmatprep.subr.bf16.mxu0 0
    %784 = vmatpush1.bf16.xpose.msra.mxu0 0
    %785 = vmatprep.subr.bf16.mxu0 0
    %786 = vmatpush1.bf16.xpose.msra.mxu0 0
    %787 = vmatprep.mubr.bf16.mxu0 0
    %788 = vmatmul.mubr.bf16.gmra.mrb[0].mxu0 %v750
    %v789 = vpop.f32.mrb[0].mxu0
    %v790 = vadd.f32 0.0, %v789
    %v791 = vpop.f32.mrb[0].mxu0
    %v792 = vpop.f32.mrb[0].mxu0
    %v793 = vpop.f32.mrb[0].mxu0
    %794 = vdwg.mxu0
    %796 = vrot.lane.b32.xlu0 %v294, 112
    %v797 = vpop.permute.xlu0 %796
    %798 = vrot.lane.b32.xlu0 %v298, 48
    %v799 = vpop.permute.xlu0 %798
    %v801 = vsel %vm322, %v797, 0
    %v804 = vsel %vm322, %v799, 0
    %806 = vmatprep.subr.bf16.mxu0 0
    %807 = vmatpush1.bf16.xpose.msra.mxu0 %v804
    %808 = vmatprep.subr.bf16.mxu0 0
    %809 = vmatpush1.bf16.xpose.msra.mxu0 0
    %810 = vmatprep.subr.bf16.mxu0 0
    %811 = vmatpush1.bf16.xpose.msra.mxu0 0
    %812 = vmatprep.subr.bf16.mxu0 0
    %813 = vmatpush1.bf16.xpose.msra.mxu0 0
    %814 = vmatprep.subr.bf16.mxu0 0
    %815 = vmatpush1.bf16.xpose.msra.mxu0 0
    %816 = vmatprep.subr.bf16.mxu0 0
    %817 = vmatpush1.bf16.xpose.msra.mxu0 0
    %818 = vmatprep.subr.bf16.mxu0 0
    %819 = vmatpush1.bf16.xpose.msra.mxu0 0
    %820 = vmatprep.subr.bf16.mxu0 0
    %821 = vmatpush1.bf16.xpose.msra.mxu0 0
    %822 = vmatprep.subr.bf16.mxu0 0
    %823 = vmatpush1.bf16.xpose.msra.mxu0 0
    %824 = vmatprep.subr.bf16.mxu0 0
    %825 = vmatpush1.bf16.xpose.msra.mxu0 0
    %826 = vmatprep.subr.bf16.mxu0 0
    %827 = vmatpush1.bf16.xpose.msra.mxu0 0
    %828 = vmatprep.subr.bf16.mxu0 0
    %829 = vmatpush1.bf16.xpose.msra.mxu0 0
    %830 = vmatprep.subr.bf16.mxu0 0
    %831 = vmatpush1.bf16.xpose.msra.mxu0 0
    %832 = vmatprep.subr.bf16.mxu0 0
    %833 = vmatpush1.bf16.xpose.msra.mxu0 0
    %834 = vmatprep.subr.bf16.mxu0 0
    %835 = vmatpush1.bf16.xpose.msra.mxu0 0
    %836 = vmatprep.subr.bf16.mxu0 0
    %837 = vmatpush1.bf16.xpose.msra.mxu0 0
    %838 = vmatprep.mubr.bf16.mxu0 0
    %839 = vmatmul.mubr.bf16.gmra.mrb[0].mxu0 %v801
    %v840 = vpop.f32.mrb[0].mxu0
    %v841 = vadd.f32 0.0, %v840
    %v842 = vpop.f32.mrb[0].mxu0
    %v843 = vpop.f32.mrb[0].mxu0
    %v844 = vpop.f32.mrb[0].mxu0
    %845 = vdwg.mxu0
    %847 = vrot.lane.b32.xlu0 %v295, 112
    %v848 = vpop.permute.xlu0 %847
    %849 = vrot.lane.b32.xlu0 %v299, 48
    %v850 = vpop.permute.xlu0 %849
    %v852 = vsel %vm322, %v848, 0
    %v855 = vsel %vm322, %v850, 0
    %857 = vmatprep.subr.bf16.mxu0 0
    %858 = vmatpush1.bf16.xpose.msra.mxu0 %v855
    %859 = vmatprep.subr.bf16.mxu0 0
    %860 = vmatpush1.bf16.xpose.msra.mxu0 0
    %861 = vmatprep.subr.bf16.mxu0 0
    %862 = vmatpush1.bf16.xpose.msra.mxu0 0
    %863 = vmatprep.subr.bf16.mxu0 0
    %864 = vmatpush1.bf16.xpose.msra.mxu0 0
    %865 = vmatprep.subr.bf16.mxu0 0
    %866 = vmatpush1.bf16.xpose.msra.mxu0 0
    %867 = vmatprep.subr.bf16.mxu0 0
    %868 = vmatpush1.bf16.xpose.msra.mxu0 0
    %869 = vmatprep.subr.bf16.mxu0 0
    %870 = vmatpush1.bf16.xpose.msra.mxu0 0
    %871 = vmatprep.subr.bf16.mxu0 0
    %872 = vmatpush1.bf16.xpose.msra.mxu0 0
    %873 = vmatprep.subr.bf16.mxu0 0
    %874 = vmatpush1.bf16.xpose.msra.mxu0 0
    %875 = vmatprep.subr.bf16.mxu0 0
    %876 = vmatpush1.bf16.xpose.msra.mxu0 0
    %877 = vmatprep.subr.bf16.mxu0 0
    %878 = vmatpush1.bf16.xpose.msra.mxu0 0
    %879 = vmatprep.subr.bf16.mxu0 0
    %880 = vmatpush1.bf16.xpose.msra.mxu0 0
    %881 = vmatprep.subr.bf16.mxu0 0
    %882 = vmatpush1.bf16.xpose.msra.mxu0 0
    %883 = vmatprep.subr.bf16.mxu0 0
    %884 = vmatpush1.bf16.xpose.msra.mxu0 0
    %885 = vmatprep.subr.bf16.mxu0 0
    %886 = vmatpush1.bf16.xpose.msra.mxu0 0
    %887 = vmatprep.subr.bf16.mxu0 0
    %888 = vmatpush1.bf16.xpose.msra.mxu0 0
    %889 = vmatprep.mubr.bf16.mxu0 0
    %890 = vmatmul.mubr.bf16.gmra.mrb[0].mxu0 %v852
    %v891 = vpop.f32.mrb[0].mxu0
    %v892 = vadd.f32 0.0, %v891
    %v893 = vpop.f32.mrb[0].mxu0
    %v894 = vpop.f32.mrb[0].mxu0
    %v895 = vpop.f32.mrb[0].mxu0
    %896 = vdwg.mxu0
    %898 = vrot.lane.b32.xlu0 %v296, 112
    %v899 = vpop.permute.xlu0 %898
    %900 = vrot.lane.b32.xlu0 %v300, 48
    %v901 = vpop.permute.xlu0 %900
    %v903 = vsel %vm322, %v899, 0
    %v906 = vsel %vm322, %v901, 0
    %908 = vmatprep.subr.bf16.mxu0 0
    %909 = vmatpush1.bf16.xpose.msra.mxu0 %v906
    %910 = vmatprep.subr.bf16.mxu0 0
    %911 = vmatpush1.bf16.xpose.msra.mxu0 0
    %912 = vmatprep.subr.bf16.mxu0 0
    %913 = vmatpush1.bf16.xpose.msra.mxu0 0
    %914 = vmatprep.subr.bf16.mxu0 0
    %915 = vmatpush1.bf16.xpose.msra.mxu0 0
    %916 = vmatprep.subr.bf16.mxu0 0
    %917 = vmatpush1.bf16.xpose.msra.mxu0 0
    %918 = vmatprep.subr.bf16.mxu0 0
    %919 = vmatpush1.bf16.xpose.msra.mxu0 0
    %920 = vmatprep.subr.bf16.mxu0 0
    %921 = vmatpush1.bf16.xpose.msra.mxu0 0
    %922 = vmatprep.subr.bf16.mxu0 0
    %923 = vmatpush1.bf16.xpose.msra.mxu0 0
    %924 = vmatprep.subr.bf16.mxu0 0
    %925 = vmatpush1.bf16.xpose.msra.mxu0 0
    %926 = vmatprep.subr.bf16.mxu0 0
    %927 = vmatpush1.bf16.xpose.msra.mxu0 0
    %928 = vmatprep.subr.bf16.mxu0 0
    %929 = vmatpush1.bf16.xpose.msra.mxu0 0
    %930 = vmatprep.subr.bf16.mxu0 0
    %931 = vmatpush1.bf16.xpose.msra.mxu0 0
    %932 = vmatprep.subr.bf16.mxu0 0
    %933 = vmatpush1.bf16.xpose.msra.mxu0 0
    %934 = vmatprep.subr.bf16.mxu0 0
    %935 = vmatpush1.bf16.xpose.msra.mxu0 0
    %936 = vmatprep.subr.bf16.mxu0 0
    %937 = vmatpush1.bf16.xpose.msra.mxu0 0
    %938 = vmatprep.subr.bf16.mxu0 0
    %939 = vmatpush1.bf16.xpose.msra.mxu0 0
    %940 = vmatprep.mubr.bf16.mxu0 0
    %941 = vmatmul.mubr.bf16.gmra.mrb[0].mxu0 %v903
    %v942 = vpop.f32.mrb[0].mxu0
    %v943 = vadd.f32 0.0, %v942
    %v944 = vpop.f32.mrb[0].mxu0
    %v945 = vpop.f32.mrb[0].mxu0
    %v946 = vpop.f32.mrb[0].mxu0
    %947 = vdwg.mxu0
    %v948 = vsel %vm517, %v790, -2.3819763e+38
    %v949 = vsel %vm517, %v841, -2.3819763e+38
    %v950 = vsel %vm517, %v892, -2.3819763e+38
    %v951 = vsel %vm517, %v943, -2.3819763e+38
    %v952 = vsel %vm322, %v948, -inf
    %953 = vmax.xlane.f32.xlu0 %v952
    %v954 = vpop.xlane.xlu0 %953
    %v955 = vsel %vm322, %v949, -inf
    %956 = vmax.xlane.f32.xlu0 %v955
    %v957 = vpop.xlane.xlu0 %956
    %v958 = vsel %vm322, %v950, -inf
    %959 = vmax.xlane.f32.xlu0 %v958
    %v960 = vpop.xlane.xlu0 %959
    %v961 = vsel %vm322, %v951, -inf
    %962 = vmax.xlane.f32.xlu0 %v961
    %v963 = vpop.xlane.xlu0 %962
    %v964 = vsub.f32 %v948, %v954
    %v965 = vsub.f32 %v949, %v957
    %v966 = vsub.f32 %v950, %v960
    %v967 = vsub.f32 %v951, %v963
    %v968 = vmul.f32 %v964, 1.442695
    %v969 = vpow.pop %v968
    %v970 = vmul.f32 %v965, 1.442695
    %v971 = vpow.pop %v970
    %v972 = vmul.f32 %v966, 1.442695
    %v973 = vpow.pop %v972
    %v974 = vmul.f32 %v967, 1.442695
    %v975 = vpow.pop %v974
    %v976 = vsel %vm322, %v969, 0.0
    %977 = vadd.xlane.f32.xlu0 %v976
    %v978 = vpop.xlane.xlu0 %977
    %v979 = vsel %vm322, %v971, 0.0
    %980 = vadd.xlane.f32.xlu0 %v979
    %v981 = vpop.xlane.xlu0 %980
    %v982 = vsel %vm322, %v973, 0.0
    %983 = vadd.xlane.f32.xlu0 %v982
    %v984 = vpop.xlane.xlu0 %983
    %v985 = vsel %vm322, %v975, 0.0
    %986 = vadd.xlane.f32.xlu0 %v985
    %v987 = vpop.xlane.xlu0 %986
    %v988 = vrcp.pop %v978
    %v989 = vrcp.pop %v981
    %v990 = vrcp.pop %v984
    %v991 = vrcp.pop %v987
    %v992 = vmul.f32 %v969, %v988
    %v993 = vmul.f32 %v971, %v989
    %v994 = vmul.f32 %v973, %v990
    %v995 = vmul.f32 %v975, %v991
    %v996 = vpack.c.bf16 %v992, %v992
    %v997 = vpack.c.bf16 %v993, %v993
    %v998 = vpack.c.bf16 %v994, %v994
    %v999 = vpack.c.bf16 %v995, %v995
    %1001 = vrot.lane.b32.xlu0 %v301, 112
    %v1002 = vpop.permute.xlu0 %1001
    %v1005 = vsel %vm322, %v996, 0
    %1007 = vmatprep.subr.bf16.mxu0 0
    %1008 = vmatpush1.bf16.msra.mxu0 %v1002
    %1009 = vmatprep.subr.bf16.mxu0 0
    %1010 = vmatpush1.bf16.msra.mxu0 0
    %1011 = vmatprep.subr.bf16.mxu0 0
    %1012 = vmatpush1.bf16.msra.mxu0 0
    %1013 = vmatprep.subr.bf16.mxu0 0
    %1014 = vmatpush1.bf16.msra.mxu0 0
    %1015 = vmatprep.subr.bf16.mxu0 0
    %1016 = vmatpush1.bf16.msra.mxu0 0
    %1017 = vmatprep.subr.bf16.mxu0 0
    %1018 = vmatpush1.bf16.msra.mxu0 0
    %1019 = vmatprep.subr.bf16.mxu0 0
    %1020 = vmatpush1.bf16.msra.mxu0 0
    %1021 = vmatprep.subr.bf16.mxu0 0
    %1022 = vmatpush1.bf16.msra.mxu0 0
    %1023 = vmatprep.subr.bf16.mxu0 0
    %1024 = vmatpush1.bf16.msra.mxu0 0
    %1025 = vmatprep.subr.bf16.mxu0 0
    %1026 = vmatpush1.bf16.msra.mxu0 0
    %1027 = vmatprep.subr.bf16.mxu0 0
    %1028 = vmatpush1.bf16.msra.mxu0 0
    %1029 = vmatprep.subr.bf16.mxu0 0
    %1030 = vmatpush1.bf16.msra.mxu0 0
    %1031 = vmatprep.subr.bf16.mxu0 0
    %1032 = vmatpush1.bf16.msra.mxu0 0
    %1033 = vmatprep.subr.bf16.mxu0 0
    %1034 = vmatpush1.bf16.msra.mxu0 0
    %1035 = vmatprep.subr.bf16.mxu0 0
    %1036 = vmatpush1.bf16.msra.mxu0 0
    %1037 = vmatprep.subr.bf16.mxu0 0
    %1038 = vmatpush1.bf16.msra.mxu0 0
    %1039 = vmatprep.mubr.bf16.mxu0 0
    %1040 = vmatmul.mubr.bf16.gmra.mrb[0].mxu0 %v1005
    %v1041 = vpop.f32.mrb[0].mxu0
    %v1042 = vadd.f32 0.0, %v1041
    %v1043 = vpop.f32.mrb[0].mxu0
    %v1044 = vpop.f32.mrb[0].mxu0
    %v1045 = vpop.f32.mrb[0].mxu0
    %1046 = vdwg.mxu0
    %1048 = vrot.lane.b32.xlu0 %v302, 112
    %v1049 = vpop.permute.xlu0 %1048
    %v1052 = vsel %vm322, %v997, 0
    %1054 = vmatprep.subr.bf16.mxu0 0
    %1055 = vmatpush1.bf16.msra.mxu0 %v1049
    %1056 = vmatprep.subr.bf16.mxu0 0
    %1057 = vmatpush1.bf16.msra.mxu0 0
    %1058 = vmatprep.subr.bf16.mxu0 0
    %1059 = vmatpush1.bf16.msra.mxu0 0
    %1060 = vmatprep.subr.bf16.mxu0 0
    %1061 = vmatpush1.bf16.msra.mxu0 0
    %1062 = vmatprep.subr.bf16.mxu0 0
    %1063 = vmatpush1.bf16.msra.mxu0 0
    %1064 = vmatprep.subr.bf16.mxu0 0
    %1065 = vmatpush1.bf16.msra.mxu0 0
    %1066 = vmatprep.subr.bf16.mxu0 0
    %1067 = vmatpush1.bf16.msra.mxu0 0
    %1068 = vmatprep.subr.bf16.mxu0 0
    %1069 = vmatpush1.bf16.msra.mxu0 0
    %1070 = vmatprep.subr.bf16.mxu0 0
    %1071 = vmatpush1.bf16.msra.mxu0 0
    %1072 = vmatprep.subr.bf16.mxu0 0
    %1073 = vmatpush1.bf16.msra.mxu0 0
    %1074 = vmatprep.subr.bf16.mxu0 0
    %1075 = vmatpush1.bf16.msra.mxu0 0
    %1076 = vmatprep.subr.bf16.mxu0 0
    %1077 = vmatpush1.bf16.msra.mxu0 0
    %1078 = vmatprep.subr.bf16.mxu0 0
    %1079 = vmatpush1.bf16.msra.mxu0 0
    %1080 = vmatprep.subr.bf16.mxu0 0
    %1081 = vmatpush1.bf16.msra.mxu0 0
    %1082 = vmatprep.subr.bf16.mxu0 0
    %1083 = vmatpush1.bf16.msra.mxu0 0
    %1084 = vmatprep.subr.bf16.mxu0 0
    %1085 = vmatpush1.bf16.msra.mxu0 0
    %1086 = vmatprep.mubr.bf16.mxu0 0
    %1087 = vmatmul.mubr.bf16.gmra.mrb[0].mxu0 %v1052
    %v1088 = vpop.f32.mrb[0].mxu0
    %v1089 = vadd.f32 0.0, %v1088
    %v1090 = vpop.f32.mrb[0].mxu0
    %v1091 = vpop.f32.mrb[0].mxu0
    %v1092 = vpop.f32.mrb[0].mxu0
    %1093 = vdwg.mxu0
    %1095 = vrot.lane.b32.xlu0 %v303, 112
    %v1096 = vpop.permute.xlu0 %1095
    %v1099 = vsel %vm322, %v998, 0
    %1101 = vmatprep.subr.bf16.mxu0 0
    %1102 = vmatpush1.bf16.msra.mxu0 %v1096
    %1103 = vmatprep.subr.bf16.mxu0 0
    %1104 = vmatpush1.bf16.msra.mxu0 0
    %1105 = vmatprep.subr.bf16.mxu0 0
    %1106 = vmatpush1.bf16.msra.mxu0 0
    %1107 = vmatprep.subr.bf16.mxu0 0
    %1108 = vmatpush1.bf16.msra.mxu0 0
    %1109 = vmatprep.subr.bf16.mxu0 0
    %1110 = vmatpush1.bf16.msra.mxu0 0
    %1111 = vmatprep.subr.bf16.mxu0 0
    %1112 = vmatpush1.bf16.msra.mxu0 0
    %1113 = vmatprep.subr.bf16.mxu0 0
    %1114 = vmatpush1.bf16.msra.mxu0 0
    %1115 = vmatprep.subr.bf16.mxu0 0
    %1116 = vmatpush1.bf16.msra.mxu0 0
    %1117 = vmatprep.subr.bf16.mxu0 0
    %1118 = vmatpush1.bf16.msra.mxu0 0
    %1119 = vmatprep.subr.bf16.mxu0 0
    %1120 = vmatpush1.bf16.msra.mxu0 0
    %1121 = vmatprep.subr.bf16.mxu0 0
    %1122 = vmatpush1.bf16.msra.mxu0 0
    %1123 = vmatprep.subr.bf16.mxu0 0
    %1124 = vmatpush1.bf16.msra.mxu0 0
    %1125 = vmatprep.subr.bf16.mxu0 0
    %1126 = vmatpush1.bf16.msra.mxu0 0
    %1127 = vmatprep.subr.bf16.mxu0 0
    %1128 = vmatpush1.bf16.msra.mxu0 0
    %1129 = vmatprep.subr.bf16.mxu0 0
    %1130 = vmatpush1.bf16.msra.mxu0 0
    %1131 = vmatprep.subr.bf16.mxu0 0
    %1132 = vmatpush1.bf16.msra.mxu0 0
    %1133 = vmatprep.mubr.bf16.mxu0 0
    %1134 = vmatmul.mubr.bf16.gmra.mrb[0].mxu0 %v1099
    %v1135 = vpop.f32.mrb[0].mxu0
    %v1136 = vadd.f32 0.0, %v1135
    %v1137 = vpop.f32.mrb[0].mxu0
    %v1138 = vpop.f32.mrb[0].mxu0
    %v1139 = vpop.f32.mrb[0].mxu0
    %1140 = vdwg.mxu0
    %1142 = vrot.lane.b32.xlu0 %v304, 112
    %v1143 = vpop.permute.xlu0 %1142
    %v1146 = vsel %vm322, %v999, 0
    %1148 = vmatprep.subr.bf16.mxu0 0
    %1149 = vmatpush1.bf16.msra.mxu0 %v1143
    %1150 = vmatprep.subr.bf16.mxu0 0
    %1151 = vmatpush1.bf16.msra.mxu0 0
    %1152 = vmatprep.subr.bf16.mxu0 0
    %1153 = vmatpush1.bf16.msra.mxu0 0
    %1154 = vmatprep.subr.bf16.mxu0 0
    %1155 = vmatpush1.bf16.msra.mxu0 0
    %1156 = vmatprep.subr.bf16.mxu0 0
    %1157 = vmatpush1.bf16.msra.mxu0 0
    %1158 = vmatprep.subr.bf16.mxu0 0
    %1159 = vmatpush1.bf16.msra.mxu0 0
    %1160 = vmatprep.subr.bf16.mxu0 0
    %1161 = vmatpush1.bf16.msra.mxu0 0
    %1162 = vmatprep.subr.bf16.mxu0 0
    %1163 = vmatpush1.bf16.msra.mxu0 0
    %1164 = vmatprep.subr.bf16.mxu0 0
    %1165 = vmatpush1.bf16.msra.mxu0 0
    %1166 = vmatprep.subr.bf16.mxu0 0
    %1167 = vmatpush1.bf16.msra.mxu0 0
    %1168 = vmatprep.subr.bf16.mxu0 0
    %1169 = vmatpush1.bf16.msra.mxu0 0
    %1170 = vmatprep.subr.bf16.mxu0 0
    %1171 = vmatpush1.bf16.msra.mxu0 0
    %1172 = vmatprep.subr.bf16.mxu0 0
    %1173 = vmatpush1.bf16.msra.mxu0 0
    %1174 = vmatprep.subr.bf16.mxu0 0
    %1175 = vmatpush1.bf16.msra.mxu0 0
    %1176 = vmatprep.subr.bf16.mxu0 0
    %1177 = vmatpush1.bf16.msra.mxu0 0
    %1178 = vmatprep.subr.bf16.mxu0 0
    %1179 = vmatpush1.bf16.msra.mxu0 0
    %1180 = vmatprep.mubr.bf16.mxu0 0
    %1181 = vmatmul.mubr.bf16.gmra.mrb[0].mxu0 %v1146
    %v1182 = vpop.f32.mrb[0].mxu0
    %v1183 = vadd.f32 0.0, %v1182
    %v1184 = vpop.f32.mrb[0].mxu0
    %v1185 = vpop.f32.mrb[0].mxu0
    %v1186 = vpop.f32.mrb[0].mxu0
    %1187 = vdwg.mxu0
    %v1188 = vpack.c.bf16 %v1089, %v1042
    %v1189 = vpack.c.bf16 %v1183, %v1136
    %v1192 = vunpack.c.l.b16 %v307
    %v1193 = vunpack.c.l.b16 %v308
    %v1194 = vpack.c.b16 %v1193, %v1192
    %v1197 = vsel %vm322, %v1188, 0
    %v1200 = vsel %vm322, %v1189, 0
    %1202 = vmatprep.subr.bf16.mxu0 0
    %1203 = vmatpush1.bf16.msra.mxu0 %v1194
    %1204 = vmatprep.subr.bf16.mxu0 0
    %1205 = vmatpush1.bf16.msra.mxu0 0
    %1206 = vmatprep.subr.bf16.mxu0 0
    %1207 = vmatpush1.bf16.msra.mxu0 0
    %1208 = vmatprep.subr.bf16.mxu0 0
    %1209 = vmatpush1.bf16.msra.mxu0 0
    %1210 = vmatprep.subr.bf16.mxu0 0
    %1211 = vmatpush1.bf16.msra.mxu0 0
    %1212 = vmatprep.subr.bf16.mxu0 0
    %1213 = vmatpush1.bf16.msra.mxu0 0
    %1214 = vmatprep.subr.bf16.mxu0 0
    %1215 = vmatpush1.bf16.msra.mxu0 0
    %1216 = vmatprep.subr.bf16.mxu0 0
    %1217 = vmatpush1.bf16.msra.mxu0 0
    %1218 = vmatprep.subr.bf16.mxu0 0
    %1219 = vmatpush1.bf16.msra.mxu0 0
    %1220 = vmatprep.subr.bf16.mxu0 0
    %1221 = vmatpush1.bf16.msra.mxu0 0
    %1222 = vmatprep.subr.bf16.mxu0 0
    %1223 = vmatpush1.bf16.msra.mxu0 0
    %1224 = vmatprep.subr.bf16.mxu0 0
    %1225 = vmatpush1.bf16.msra.mxu0 0
    %1226 = vmatprep.subr.bf16.mxu0 0
    %1227 = vmatpush1.bf16.msra.mxu0 0
    %1228 = vmatprep.subr.bf16.mxu0 0
    %1229 = vmatpush1.bf16.msra.mxu0 0
    %1230 = vmatprep.subr.bf16.mxu0 0
    %1231 = vmatpush1.bf16.msra.mxu0 0
    %1232 = vmatprep.subr.bf16.mxu0 0
    %1233 = vmatpush1.bf16.msra.mxu0 0
    %1234 = vmatprep.mubr.bf16.mxu0 0
    %1235 = vmatmul.mubr.bf16.gmra.mrb[0].mxu0 %v1197
    %v1236 = vpop.f32.mrb[0].mxu0
    %v1237 = vadd.f32 0.0, %v1236
    %v1238 = vpop.f32.mrb[0].mxu0
    %v1239 = vpop.f32.mrb[0].mxu0
    %v1240 = vadd.f32 0.0, %v1239
    %v1241 = vpop.f32.mrb[0].mxu0
    %1242 = vmatprep.mubr.bf16.mxu0 0
    %1243 = vmatmul.mubr.bf16.gmra.mrb[0].mxu0 %v1200
    %v1244 = vpop.f32.mrb[0].mxu0
    %v1245 = vadd.f32 0.0, %v1244
    %v1246 = vpop.f32.mrb[0].mxu0
    %v1247 = vpop.f32.mrb[0].mxu0
    %v1248 = vadd.f32 0.0, %v1247
    %v1249 = vpop.f32.mrb[0].mxu0
    %1250 = vdwg.mxu0
    %v1253 = vunpack.c.l.b16 %v305
    %v1254 = vunpack.c.l.b16 %v306
    %v1255 = vpack.c.b16 %v1254, %v1253
    %v1258 = vsel %vm322, %v742, 0
    %v1261 = vsel %vm322, %v743, 0
    %1263 = vmatprep.subr.bf16.mxu0 0
    %1264 = vmatpush1.bf16.msra.mxu0 %v1255
    %1265 = vmatprep.subr.bf16.mxu0 0
    %1266 = vmatpush1.bf16.msra.mxu0 0
    %1267 = vmatprep.subr.bf16.mxu0 0
    %1268 = vmatpush1.bf16.msra.mxu0 0
    %1269 = vmatprep.subr.bf16.mxu0 0
    %1270 = vmatpush1.bf16.msra.mxu0 0
    %1271 = vmatprep.subr.bf16.mxu0 0
    %1272 = vmatpush1.bf16.msra.mxu0 0
    %1273 = vmatprep.subr.bf16.mxu0 0
    %1274 = vmatpush1.bf16.msra.mxu0 0
    %1275 = vmatprep.subr.bf16.mxu0 0
    %1276 = vmatpush1.bf16.msra.mxu0 0
    %1277 = vmatprep.subr.bf16.mxu0 0
    %1278 = vmatpush1.bf16.msra.mxu0 0
    %1279 = vmatprep.subr.bf16.mxu0 0
    %1280 = vmatpush1.bf16.msra.mxu0 0
    %1281 = vmatprep.subr.bf16.mxu0 0
    %1282 = vmatpush1.bf16.msra.mxu0 0
    %1283 = vmatprep.subr.bf16.mxu0 0
    %1284 = vmatpush1.bf16.msra.mxu0 0
    %1285 = vmatprep.subr.bf16.mxu0 0
    %1286 = vmatpush1.bf16.msra.mxu0 0
    %1287 = vmatprep.subr.bf16.mxu0 0
    %1288 = vmatpush1.bf16.msra.mxu0 0
    %1289 = vmatprep.subr.bf16.mxu0 0
    %1290 = vmatpush1.bf16.msra.mxu0 0
    %1291 = vmatprep.subr.bf16.mxu0 0
    %1292 = vmatpush1.bf16.msra.mxu0 0
    %1293 = vmatprep.subr.bf16.mxu0 0
    %1294 = vmatpush1.bf16.msra.mxu0 0
    %1295 = vmatprep.mubr.bf16.mxu0 0
    %1296 = vmatmul.mubr.bf16.gmra.mrb[0].mxu0 %v1258
    %v1297 = vpop.f32.mrb[0].mxu0
    %v1298 = vadd.f32 %v1237, %v1297
    %v1299 = vpop.f32.mrb[0].mxu0
    %v1300 = vpop.f32.mrb[0].mxu0
    %v1301 = vadd.f32 %v1240, %v1300
    %v1302 = vpop.f32.mrb[0].mxu0
    %1303 = vmatprep.mubr.bf16.mxu0 0
    %1304 = vmatmul.mubr.bf16.gmra.mrb[0].mxu0 %v1261
    %v1305 = vpop.f32.mrb[0].mxu0
    %v1306 = vadd.f32 %v1245, %v1305
    %v1307 = vpop.f32.mrb[0].mxu0
    %v1308 = vpop.f32.mrb[0].mxu0
    %v1309 = vadd.f32 %v1248, %v1308
    %v1310 = vpop.f32.mrb[0].mxu0
    %1311 = vdwg.mxu0
    %1312 = vrot.lane.b32.xlu0 %v293, 96
    %v1313 = vpop.permute.xlu0 %1312
    %1314 = vrot.lane.b32.xlu0 %v297, 32
    %v1315 = vpop.permute.xlu0 %1314
    %v1317 = vsel %vm322, %v1313, 0
    %v1320 = vsel %vm322, %v1315, 0
    %1322 = vmatprep.subr.bf16.mxu0 0
    %1323 = vmatpush1.bf16.xpose.msra.mxu0 %v1320
    %1324 = vmatprep.subr.bf16.mxu0 0
    %1325 = vmatpush1.bf16.xpose.msra.mxu0 0
    %1326 = vmatprep.subr.bf16.mxu0 0
    %1327 = vmatpush1.bf16.xpose.msra.mxu0 0
    %1328 = vmatprep.subr.bf16.mxu0 0
    %1329 = vmatpush1.bf16.xpose.msra.mxu0 0
    %1330 = vmatprep.subr.bf16.mxu0 0
    %1331 = vmatpush1.bf16.xpose.msra.mxu0 0
    %1332 = vmatprep.subr.bf16.mxu0 0
    %1333 = vmatpush1.bf16.xpose.msra.mxu0 0
    %1334 = vmatprep.subr.bf16.mxu0 0
    %1335 = vmatpush1.bf16.xpose.msra.mxu0 0
    %1336 = vmatprep.subr.bf16.mxu0 0
    %1337 = vmatpush1.bf16.xpose.msra.mxu0 0
    %1338 = vmatprep.subr.bf16.mxu0 0
    %1339 = vmatpush1.bf16.xpose.msra.mxu0 0
    %1340 = vmatprep.subr.bf16.mxu0 0
    %1341 = vmatpush1.bf16.xpose.msra.mxu0 0
    %1342 = vmatprep.subr.bf16.mxu0 0
    %1343 = vmatpush1.bf16.xpose.msra.mxu0 0
    %1344 = vmatprep.subr.bf16.mxu0 0
    %1345 = vmatpush1.bf16.xpose.msra.mxu0 0
    %1346 = vmatprep.subr.bf16.mxu0 0
    %1347 = vmatpush1.bf16.xpose.msra.mxu0 0
    %1348 = vmatprep.subr.bf16.mxu0 0
    %1349 = vmatpush1.bf16.xpose.msra.mxu0 0
    %1350 = vmatprep.subr.bf16.mxu0 0
    %1351 = vmatpush1.bf16.xpose.msra.mxu0 0
    %1352 = vmatprep.subr.bf16.mxu0 0
    %1353 = vmatpush1.bf16.xpose.msra.mxu0 0
    %1354 = vmatprep.mubr.bf16.mxu0 0
    %1355 = vmatmul.mubr.bf16.gmra.mrb[0].mxu0 %v1317
    %v1356 = vpop.f32.mrb[0].mxu0
    %v1357 = vadd.f32 0.0, %v1356
    %v1358 = vpop.f32.mrb[0].mxu0
    %v1359 = vpop.f32.mrb[0].mxu0
    %v1360 = vpop.f32.mrb[0].mxu0
    %1361 = vdwg.mxu0
    %1362 = vrot.lane.b32.xlu0 %v294, 96
    %v1363 = vpop.permute.xlu0 %1362
    %1364 = vrot.lane.b32.xlu0 %v298, 32
    %v1365 = vpop.permute.xlu0 %1364
    %v1367 = vsel %vm322, %v1363, 0
    %v1370 = vsel %vm322, %v1365, 0
    %1372 = vmatprep.subr.bf16.mxu0 0
    %1373 = vmatpush1.bf16.xpose.msra.mxu0 %v1370
    %1374 = vmatprep.subr.bf16.mxu0 0
    %1375 = vmatpush1.bf16.xpose.msra.mxu0 0
    %1376 = vmatprep.subr.bf16.mxu0 0
    %1377 = vmatpush1.bf16.xpose.msra.mxu0 0
    %1378 = vmatprep.subr.bf16.mxu0 0
    %1379 = vmatpush1.bf16.xpose.msra.mxu0 0
    %1380 = vmatprep.subr.bf16.mxu0 0
    %1381 = vmatpush1.bf16.xpose.msra.mxu0 0
    %1382 = vmatprep.subr.bf16.mxu0 0
    %1383 = vmatpush1.bf16.xpose.msra.mxu0 0
    %1384 = vmatprep.subr.bf16.mxu0 0
    %1385 = vmatpush1.bf16.xpose.msra.mxu0 0
    %1386 = vmatprep.subr.bf16.mxu0 0
    %1387 = vmatpush1.bf16.xpose.msra.mxu0 0
    %1388 = vmatprep.subr.bf16.mxu0 0
    %1389 = vmatpush1.bf16.xpose.msra.mxu0 0
    %1390 = vmatprep.subr.bf16.mxu0 0
    %1391 = vmatpush1.bf16.xpose.msra.mxu0 0
    %1392 = vmatprep.subr.bf16.mxu0 0
    %1393 = vmatpush1.bf16.xpose.msra.mxu0 0
    %1394 = vmatprep.subr.bf16.mxu0 0
    %1395 = vmatpush1.bf16.xpose.msra.mxu0 0
    %1396 = vmatprep.subr.bf16.mxu0 0
    %1397 = vmatpush1.bf16.xpose.msra.mxu0 0
    %1398 = vmatprep.subr.bf16.mxu0 0
    %1399 = vmatpush1.bf16.xpose.msra.mxu0 0
    %1400 = vmatprep.subr.bf16.mxu0 0
    %1401 = vmatpush1.bf16.xpose.msra.mxu0 0
    %1402 = vmatprep.subr.bf16.mxu0 0
    %1403 = vmatpush1.bf16.xpose.msra.mxu0 0
    %1404 = vmatprep.mubr.bf16.mxu0 0
    %1405 = vmatmul.mubr.bf16.gmra.mrb[0].mxu0 %v1367
    %v1406 = vpop.f32.mrb[0].mxu0
    %v1407 = vadd.f32 0.0, %v1406
    %v1408 = vpop.f32.mrb[0].mxu0
    %v1409 = vpop.f32.mrb[0].mxu0
    %v1410 = vpop.f32.mrb[0].mxu0
    %1411 = vdwg.mxu0
    %1412 = vrot.lane.b32.xlu0 %v295, 96
    %v1413 = vpop.permute.xlu0 %1412
    %1414 = vrot.lane.b32.xlu0 %v299, 32
    %v1415 = vpop.permute.xlu0 %1414
    %v1417 = vsel %vm322, %v1413, 0
    %v1420 = vsel %vm322, %v1415, 0
    %1422 = vmatprep.subr.bf16.mxu0 0
    %1423 = vmatpush1.bf16.xpose.msra.mxu0 %v1420
    %1424 = vmatprep.subr.bf16.mxu0 0
    %1425 = vmatpush1.bf16.xpose.msra.mxu0 0
    %1426 = vmatprep.subr.bf16.mxu0 0
    %1427 = vmatpush1.bf16.xpose.msra.mxu0 0
    %1428 = vmatprep.subr.bf16.mxu0 0
    %1429 = vmatpush1.bf16.xpose.msra.mxu0 0
    %1430 = vmatprep.subr.bf16.mxu0 0
    %1431 = vmatpush1.bf16.xpose.msra.mxu0 0
    %1432 = vmatprep.subr.bf16.mxu0 0
    %1433 = vmatpush1.bf16.xpose.msra.mxu0 0
    %1434 = vmatprep.subr.bf16.mxu0 0
    %1435 = vmatpush1.bf16.xpose.msra.mxu0 0
    %1436 = vmatprep.subr.bf16.mxu0 0
    %1437 = vmatpush1.bf16.xpose.msra.mxu0 0
    %1438 = vmatprep.subr.bf16.mxu0 0
    %1439 = vmatpush1.bf16.xpose.msra.mxu0 0
    %1440 = vmatprep.subr.bf16.mxu0 0
    %1441 = vmatpush1.bf16.xpose.msra.mxu0 0
    %1442 = vmatprep.subr.bf16.mxu0 0
    %1443 = vmatpush1.bf16.xpose.msra.mxu0 0
    %1444 = vmatprep.subr.bf16.mxu0 0
    %1445 = vmatpush1.bf16.xpose.msra.mxu0 0
    %1446 = vmatprep.subr.bf16.mxu0 0
    %1447 = vmatpush1.bf16.xpose.msra.mxu0 0
    %1448 = vmatprep.subr.bf16.mxu0 0
    %1449 = vmatpush1.bf16.xpose.msra.mxu0 0
    %1450 = vmatprep.subr.bf16.mxu0 0
    %1451 = vmatpush1.bf16.xpose.msra.mxu0 0
    %1452 = vmatprep.subr.bf16.mxu0 0
    %1453 = vmatpush1.bf16.xpose.msra.mxu0 0
    %1454 = vmatprep.mubr.bf16.mxu0 0
    %1455 = vmatmul.mubr.bf16.gmra.mrb[0].mxu0 %v1417
    %v1456 = vpop.f32.mrb[0].mxu0
    %v1457 = vadd.f32 0.0, %v1456
    %v1458 = vpop.f32.mrb[0].mxu0
    %v1459 = vpop.f32.mrb[0].mxu0
    %v1460 = vpop.f32.mrb[0].mxu0
    %1461 = vdwg.mxu0
    %1462 = vrot.lane.b32.xlu0 %v296, 96
    %v1463 = vpop.permute.xlu0 %1462
    %1464 = vrot.lane.b32.xlu0 %v300, 32
    %v1465 = vpop.permute.xlu0 %1464
    %v1467 = vsel %vm322, %v1463, 0
    %v1470 = vsel %vm322, %v1465, 0
    %1472 = vmatprep.subr.bf16.mxu0 0
    %1473 = vmatpush1.bf16.xpose.msra.mxu0 %v1470
    %1474 = vmatprep.subr.bf16.mxu0 0
    %1475 = vmatpush1.bf16.xpose.msra.mxu0 0
    %1476 = vmatprep.subr.bf16.mxu0 0
    %1477 = vmatpush1.bf16.xpose.msra.mxu0 0
    %1478 = vmatprep.subr.bf16.mxu0 0
    %1479 = vmatpush1.bf16.xpose.msra.mxu0 0
    %1480 = vmatprep.subr.bf16.mxu0 0
    %1481 = vmatpush1.bf16.xpose.msra.mxu0 0
    %1482 = vmatprep.subr.bf16.mxu0 0
    %1483 = vmatpush1.bf16.xpose.msra.mxu0 0
    %1484 = vmatprep.subr.bf16.mxu0 0
    %1485 = vmatpush1.bf16.xpose.msra.mxu0 0
    %1486 = vmatprep.subr.bf16.mxu0 0
    %1487 = vmatpush1.bf16.xpose.msra.mxu0 0
    %1488 = vmatprep.subr.bf16.mxu0 0
    %1489 = vmatpush1.bf16.xpose.msra.mxu0 0
    %1490 = vmatprep.subr.bf16.mxu0 0
    %1491 = vmatpush1.bf16.xpose.msra.mxu0 0
    %1492 = vmatprep.subr.bf16.mxu0 0
    %1493 = vmatpush1.bf16.xpose.msra.mxu0 0
    %1494 = vmatprep.subr.bf16.mxu0 0
    %1495 = vmatpush1.bf16.xpose.msra.mxu0 0
    %1496 = vmatprep.subr.bf16.mxu0 0
    %1497 = vmatpush1.bf16.xpose.msra.mxu0 0
    %1498 = vmatprep.subr.bf16.mxu0 0
    %1499 = vmatpush1.bf16.xpose.msra.mxu0 0
    %1500 = vmatprep.subr.bf16.mxu0 0
    %1501 = vmatpush1.bf16.xpose.msra.mxu0 0
    %1502 = vmatprep.subr.bf16.mxu0 0
    %1503 = vmatpush1.bf16.xpose.msra.mxu0 0
    %1504 = vmatprep.mubr.bf16.mxu0 0
    %1505 = vmatmul.mubr.bf16.gmra.mrb[0].mxu0 %v1467
    %v1506 = vpop.f32.mrb[0].mxu0
    %v1507 = vadd.f32 0.0, %v1506
    %v1508 = vpop.f32.mrb[0].mxu0
    %v1509 = vpop.f32.mrb[0].mxu0
    %v1510 = vpop.f32.mrb[0].mxu0
    %1511 = vdwg.mxu0
    %v1512 = vsel %vm517, %v1357, -2.3819763e+38
    %v1513 = vsel %vm517, %v1407, -2.3819763e+38
    %v1514 = vsel %vm517, %v1457, -2.3819763e+38
    %v1515 = vsel %vm517, %v1507, -2.3819763e+38
    %v1516 = vsel %vm322, %v1512, -inf
    %1517 = vmax.xlane.f32.xlu0 %v1516
    %v1518 = vpop.xlane.xlu0 %1517
    %v1519 = vsel %vm322, %v1513, -inf
    %1520 = vmax.xlane.f32.xlu0 %v1519
    %v1521 = vpop.xlane.xlu0 %1520
    %v1522 = vsel %vm322, %v1514, -inf
    %1523 = vmax.xlane.f32.xlu0 %v1522
    %v1524 = vpop.xlane.xlu0 %1523
    %v1525 = vsel %vm322, %v1515, -inf
    %1526 = vmax.xlane.f32.xlu0 %v1525
    %v1527 = vpop.xlane.xlu0 %1526
    %v1528 = vsub.f32 %v1512, %v1518
    %v1529 = vsub.f32 %v1513, %v1521
    %v1530 = vsub.f32 %v1514, %v1524
    %v1531 = vsub.f32 %v1515, %v1527
    %v1532 = vmul.f32 %v1528, 1.442695
    %v1533 = vpow.pop %v1532
    %v1534 = vmul.f32 %v1529, 1.442695
    %v1535 = vpow.pop %v1534
    %v1536 = vmul.f32 %v1530, 1.442695
    %v1537 = vpow.pop %v1536
    %v1538 = vmul.f32 %v1531, 1.442695
    %v1539 = vpow.pop %v1538
    %v1540 = vsel %vm322, %v1533, 0.0
    %1541 = vadd.xlane.f32.xlu0 %v1540
    %v1542 = vpop.xlane.xlu0 %1541
    %v1543 = vsel %vm322, %v1535, 0.0
    %1544 = vadd.xlane.f32.xlu0 %v1543
    %v1545 = vpop.xlane.xlu0 %1544
    %v1546 = vsel %vm322, %v1537, 0.0
    %1547 = vadd.xlane.f32.xlu0 %v1546
    %v1548 = vpop.xlane.xlu0 %1547
    %v1549 = vsel %vm322, %v1539, 0.0
    %1550 = vadd.xlane.f32.xlu0 %v1549
    %v1551 = vpop.xlane.xlu0 %1550
    %v1552 = vrcp.pop %v1542
    %v1553 = vrcp.pop %v1545
    %v1554 = vrcp.pop %v1548
    %v1555 = vrcp.pop %v1551
    %v1556 = vmul.f32 %v1533, %v1552
    %v1557 = vmul.f32 %v1535, %v1553
    %v1558 = vmul.f32 %v1537, %v1554
    %v1559 = vmul.f32 %v1539, %v1555
    %v1560 = vpack.c.bf16 %v1556, %v1556
    %v1561 = vpack.c.bf16 %v1557, %v1557
    %v1562 = vpack.c.bf16 %v1558, %v1558
    %v1563 = vpack.c.bf16 %v1559, %v1559
    %1564 = vrot.lane.b32.xlu0 %v301, 96
    %v1565 = vpop.permute.xlu0 %1564
    %v1568 = vsel %vm322, %v1560, 0
    %1570 = vmatprep.subr.bf16.mxu0 0
    %1571 = vmatpush1.bf16.msra.mxu0 %v1565
    %1572 = vmatprep.subr.bf16.mxu0 0
    %1573 = vmatpush1.bf16.msra.mxu0 0
    %1574 = vmatprep.subr.bf16.mxu0 0
    %1575 = vmatpush1.bf16.msra.mxu0 0
    %1576 = vmatprep.subr.bf16.mxu0 0
    %1577 = vmatpush1.bf16.msra.mxu0 0
    %1578 = vmatprep.subr.bf16.mxu0 0
    %1579 = vmatpush1.bf16.msra.mxu0 0
    %1580 = vmatprep.subr.bf16.mxu0 0
    %1581 = vmatpush1.bf16.msra.mxu0 0
    %1582 = vmatprep.subr.bf16.mxu0 0
    %1583 = vmatpush1.bf16.msra.mxu0 0
    %1584 = vmatprep.subr.bf16.mxu0 0
    %1585 = vmatpush1.bf16.msra.mxu0 0
    %1586 = vmatprep.subr.bf16.mxu0 0
    %1587 = vmatpush1.bf16.msra.mxu0 0
    %1588 = vmatprep.subr.bf16.mxu0 0
    %1589 = vmatpush1.bf16.msra.mxu0 0
    %1590 = vmatprep.subr.bf16.mxu0 0
    %1591 = vmatpush1.bf16.msra.mxu0 0
    %1592 = vmatprep.subr.bf16.mxu0 0
    %1593 = vmatpush1.bf16.msra.mxu0 0
    %1594 = vmatprep.subr.bf16.mxu0 0
    %1595 = vmatpush1.bf16.msra.mxu0 0
    %1596 = vmatprep.subr.bf16.mxu0 0
    %1597 = vmatpush1.bf16.msra.mxu0 0
    %1598 = vmatprep.subr.bf16.mxu0 0
    %1599 = vmatpush1.bf16.msra.mxu0 0
    %1600 = vmatprep.subr.bf16.mxu0 0
    %1601 = vmatpush1.bf16.msra.mxu0 0
    %1602 = vmatprep.mubr.bf16.mxu0 0
    %1603 = vmatmul.mubr.bf16.gmra.mrb[0].mxu0 %v1568
    %v1604 = vpop.f32.mrb[0].mxu0
    %v1605 = vadd.f32 0.0, %v1604
    %v1606 = vpop.f32.mrb[0].mxu0
    %v1607 = vpop.f32.mrb[0].mxu0
    %v1608 = vpop.f32.mrb[0].mxu0
    %1609 = vdwg.mxu0
    %1610 = vrot.lane.b32.xlu0 %v302, 96
    %v1611 = vpop.permute.xlu0 %1610
    %v1614 = vsel %vm322, %v1561, 0
    %1616 = vmatprep.subr.bf16.mxu0 0
    %1617 = vmatpush1.bf16.msra.mxu0 %v1611
    %1618 = vmatprep.subr.bf16.mxu0 0
    %1619 = vmatpush1.bf16.msra.mxu0 0
    %1620 = vmatprep.subr.bf16.mxu0 0
    %1621 = vmatpush1.bf16.msra.mxu0 0
    %1622 = vmatprep.subr.bf16.mxu0 0
    %1623 = vmatpush1.bf16.msra.mxu0 0
    %1624 = vmatprep.subr.bf16.mxu0 0
    %1625 = vmatpush1.bf16.msra.mxu0 0
    %1626 = vmatprep.subr.bf16.mxu0 0
    %1627 = vmatpush1.bf16.msra.mxu0 0
    %1628 = vmatprep.subr.bf16.mxu0 0
    %1629 = vmatpush1.bf16.msra.mxu0 0
    %1630 = vmatprep.subr.bf16.mxu0 0
    %1631 = vmatpush1.bf16.msra.mxu0 0
    %1632 = vmatprep.subr.bf16.mxu0 0
    %1633 = vmatpush1.bf16.msra.mxu0 0
    %1634 = vmatprep.subr.bf16.mxu0 0
    %1635 = vmatpush1.bf16.msra.mxu0 0
    %1636 = vmatprep.subr.bf16.mxu0 0
    %1637 = vmatpush1.bf16.msra.mxu0 0
    %1638 = vmatprep.subr.bf16.mxu0 0
    %1639 = vmatpush1.bf16.msra.mxu0 0
    %1640 = vmatprep.subr.bf16.mxu0 0
    %1641 = vmatpush1.bf16.msra.mxu0 0
    %1642 = vmatprep.subr.bf16.mxu0 0
    %1643 = vmatpush1.bf16.msra.mxu0 0
    %1644 = vmatprep.subr.bf16.mxu0 0
    %1645 = vmatpush1.bf16.msra.mxu0 0
    %1646 = vmatprep.subr.bf16.mxu0 0
    %1647 = vmatpush1.bf16.msra.mxu0 0
    %1648 = vmatprep.mubr.bf16.mxu0 0
    %1649 = vmatmul.mubr.bf16.gmra.mrb[0].mxu0 %v1614
    %v1650 = vpop.f32.mrb[0].mxu0
    %v1651 = vadd.f32 0.0, %v1650
    %v1652 = vpop.f32.mrb[0].mxu0
    %v1653 = vpop.f32.mrb[0].mxu0
    %v1654 = vpop.f32.mrb[0].mxu0
    %1655 = vdwg.mxu0
    %1656 = vrot.lane.b32.xlu0 %v303, 96
    %v1657 = vpop.permute.xlu0 %1656
    %v1660 = vsel %vm322, %v1562, 0
    %1662 = vmatprep.subr.bf16.mxu0 0
    %1663 = vmatpush1.bf16.msra.mxu0 %v1657
    %1664 = vmatprep.subr.bf16.mxu0 0
    %1665 = vmatpush1.bf16.msra.mxu0 0
    %1666 = vmatprep.subr.bf16.mxu0 0
    %1667 = vmatpush1.bf16.msra.mxu0 0
    %1668 = vmatprep.subr.bf16.mxu0 0
    %1669 = vmatpush1.bf16.msra.mxu0 0
    %1670 = vmatprep.subr.bf16.mxu0 0
    %1671 = vmatpush1.bf16.msra.mxu0 0
    %1672 = vmatprep.subr.bf16.mxu0 0
    %1673 = vmatpush1.bf16.msra.mxu0 0
    %1674 = vmatprep.subr.bf16.mxu0 0
    %1675 = vmatpush1.bf16.msra.mxu0 0
    %1676 = vmatprep.subr.bf16.mxu0 0
    %1677 = vmatpush1.bf16.msra.mxu0 0
    %1678 = vmatprep.subr.bf16.mxu0 0
    %1679 = vmatpush1.bf16.msra.mxu0 0
    %1680 = vmatprep.subr.bf16.mxu0 0
    %1681 = vmatpush1.bf16.msra.mxu0 0
    %1682 = vmatprep.subr.bf16.mxu0 0
    %1683 = vmatpush1.bf16.msra.mxu0 0
    %1684 = vmatprep.subr.bf16.mxu0 0
    %1685 = vmatpush1.bf16.msra.mxu0 0
    %1686 = vmatprep.subr.bf16.mxu0 0
    %1687 = vmatpush1.bf16.msra.mxu0 0
    %1688 = vmatprep.subr.bf16.mxu0 0
    %1689 = vmatpush1.bf16.msra.mxu0 0
    %1690 = vmatprep.subr.bf16.mxu0 0
    %1691 = vmatpush1.bf16.msra.mxu0 0
    %1692 = vmatprep.subr.bf16.mxu0 0
    %1693 = vmatpush1.bf16.msra.mxu0 0
    %1694 = vmatprep.mubr.bf16.mxu0 0
    %1695 = vmatmul.mubr.bf16.gmra.mrb[0].mxu0 %v1660
    %v1696 = vpop.f32.mrb[0].mxu0
    %v1697 = vadd.f32 0.0, %v1696
    %v1698 = vpop.f32.mrb[0].mxu0
    %v1699 = vpop.f32.mrb[0].mxu0
    %v1700 = vpop.f32.mrb[0].mxu0
    %1701 = vdwg.mxu0
    %1702 = vrot.lane.b32.xlu0 %v304, 96
    %v1703 = vpop.permute.xlu0 %1702
    %v1706 = vsel %vm322, %v1563, 0
    %1708 = vmatprep.subr.bf16.mxu0 0
    %1709 = vmatpush1.bf16.msra.mxu0 %v1703
    %1710 = vmatprep.subr.bf16.mxu0 0
    %1711 = vmatpush1.bf16.msra.mxu0 0
    %1712 = vmatprep.subr.bf16.mxu0 0
    %1713 = vmatpush1.bf16.msra.mxu0 0
    %1714 = vmatprep.subr.bf16.mxu0 0
    %1715 = vmatpush1.bf16.msra.mxu0 0
    %1716 = vmatprep.subr.bf16.mxu0 0
    %1717 = vmatpush1.bf16.msra.mxu0 0
    %1718 = vmatprep.subr.bf16.mxu0 0
    %1719 = vmatpush1.bf16.msra.mxu0 0
    %1720 = vmatprep.subr.bf16.mxu0 0
    %1721 = vmatpush1.bf16.msra.mxu0 0
    %1722 = vmatprep.subr.bf16.mxu0 0
    %1723 = vmatpush1.bf16.msra.mxu0 0
    %1724 = vmatprep.subr.bf16.mxu0 0
    %1725 = vmatpush1.bf16.msra.mxu0 0
    %1726 = vmatprep.subr.bf16.mxu0 0
    %1727 = vmatpush1.bf16.msra.mxu0 0
    %1728 = vmatprep.subr.bf16.mxu0 0
    %1729 = vmatpush1.bf16.msra.mxu0 0
    %1730 = vmatprep.subr.bf16.mxu0 0
    %1731 = vmatpush1.bf16.msra.mxu0 0
    %1732 = vmatprep.subr.bf16.mxu0 0
    %1733 = vmatpush1.bf16.msra.mxu0 0
    %1734 = vmatprep.subr.bf16.mxu0 0
    %1735 = vmatpush1.bf16.msra.mxu0 0
    %1736 = vmatprep.subr.bf16.mxu0 0
    %1737 = vmatpush1.bf16.msra.mxu0 0
    %1738 = vmatprep.subr.bf16.mxu0 0
    %1739 = vmatpush1.bf16.msra.mxu0 0
    %1740 = vmatprep.mubr.bf16.mxu0 0
    %1741 = vmatmul.mubr.bf16.gmra.mrb[0].mxu0 %v1706
    %v1742 = vpop.f32.mrb[0].mxu0
    %v1743 = vadd.f32 0.0, %v1742
    %v1744 = vpop.f32.mrb[0].mxu0
    %v1745 = vpop.f32.mrb[0].mxu0
    %v1746 = vpop.f32.mrb[0].mxu0
    %1747 = vdwg.mxu0
    %v1748 = vpack.c.bf16 %v1651, %v1605
    %v1749 = vpack.c.bf16 %v1743, %v1697
    %v1752 = vunpack.c.l.b16 %v309
    %v1753 = vunpack.c.l.b16 %v310
    %v1754 = vpack.c.b16 %v1753, %v1752
    %v1757 = vsel %vm322, %v1748, 0
    %v1760 = vsel %vm322, %v1749, 0
    %1762 = vmatprep.subr.bf16.mxu0 0
    %1763 = vmatpush1.bf16.msra.mxu0 %v1754
    %1764 = vmatprep.subr.bf16.mxu0 0
    %1765 = vmatpush1.bf16.msra.mxu0 0
    %1766 = vmatprep.subr.bf16.mxu0 0
    %1767 = vmatpush1.bf16.msra.mxu0 0
    %1768 = vmatprep.subr.bf16.mxu0 0
    %1769 = vmatpush1.bf16.msra.mxu0 0
    %1770 = vmatprep.subr.bf16.mxu0 0
    %1771 = vmatpush1.bf16.msra.mxu0 0
    %1772 = vmatprep.subr.bf16.mxu0 0
    %1773 = vmatpush1.bf16.msra.mxu0 0
    %1774 = vmatprep.subr.bf16.mxu0 0
    %1775 = vmatpush1.bf16.msra.mxu0 0
    %1776 = vmatprep.subr.bf16.mxu0 0
    %1777 = vmatpush1.bf16.msra.mxu0 0
    %1778 = vmatprep.subr.bf16.mxu0 0
    %1779 = vmatpush1.bf16.msra.mxu0 0
    %1780 = vmatprep.subr.bf16.mxu0 0
    %1781 = vmatpush1.bf16.msra.mxu0 0
    %1782 = vmatprep.subr.bf16.mxu0 0
    %1783 = vmatpush1.bf16.msra.mxu0 0
    %1784 = vmatprep.subr.bf16.mxu0 0
    %1785 = vmatpush1.bf16.msra.mxu0 0
    %1786 = vmatprep.subr.bf16.mxu0 0
    %1787 = vmatpush1.bf16.msra.mxu0 0
    %1788 = vmatprep.subr.bf16.mxu0 0
    %1789 = vmatpush1.bf16.msra.mxu0 0
    %1790 = vmatprep.subr.bf16.mxu0 0
    %1791 = vmatpush1.bf16.msra.mxu0 0
    %1792 = vmatprep.subr.bf16.mxu0 0
    %1793 = vmatpush1.bf16.msra.mxu0 0
    %1794 = vmatprep.mubr.bf16.mxu0 0
    %1795 = vmatmul.mubr.bf16.gmra.mrb[0].mxu0 %v1757
    %v1796 = vpop.f32.mrb[0].mxu0
    %v1797 = vadd.f32 0.0, %v1796
    %v1798 = vpop.f32.mrb[0].mxu0
    %v1799 = vpop.f32.mrb[0].mxu0
    %v1800 = vadd.f32 0.0, %v1799
    %v1801 = vpop.f32.mrb[0].mxu0
    %1802 = vmatprep.mubr.bf16.mxu0 0
    %1803 = vmatmul.mubr.bf16.gmra.mrb[0].mxu0 %v1760
    %v1804 = vpop.f32.mrb[0].mxu0
    %v1805 = vadd.f32 0.0, %v1804
    %v1806 = vpop.f32.mrb[0].mxu0
    %v1807 = vpop.f32.mrb[0].mxu0
    %v1808 = vadd.f32 0.0, %v1807
    %v1809 = vpop.f32.mrb[0].mxu0
    %1810 = vdwg.mxu0
    %v1811 = vadd.f32 %v1298, %v1797
    %v1812 = vadd.f32 %v1301, %v1800
    %v1813 = vadd.f32 %v1306, %v1805
    %v1814 = vadd.f32 %v1309, %v1808
    %1815 = vrot.lane.b32.xlu0 %v293, 80
    %v1816 = vpop.permute.xlu0 %1815
    %1817 = vrot.lane.b32.xlu0 %v297, 16
    %v1818 = vpop.permute.xlu0 %1817
    %v1820 = vsel %vm322, %v1816, 0
    %v1823 = vsel %vm322, %v1818, 0
    %1825 = vmatprep.subr.bf16.mxu0 0
    %1826 = vmatpush1.bf16.xpose.msra.mxu0 %v1823
    %1827 = vmatprep.subr.bf16.mxu0 0
    %1828 = vmatpush1.bf16.xpose.msra.mxu0 0
    %1829 = vmatprep.subr.bf16.mxu0 0
    %1830 = vmatpush1.bf16.xpose.msra.mxu0 0
    %1831 = vmatprep.subr.bf16.mxu0 0
    %1832 = vmatpush1.bf16.xpose.msra.mxu0 0
    %1833 = vmatprep.subr.bf16.mxu0 0
    %1834 = vmatpush1.bf16.xpose.msra.mxu0 0
    %1835 = vmatprep.subr.bf16.mxu0 0
    %1836 = vmatpush1.bf16.xpose.msra.mxu0 0
    %1837 = vmatprep.subr.bf16.mxu0 0
    %1838 = vmatpush1.bf16.xpose.msra.mxu0 0
    %1839 = vmatprep.subr.bf16.mxu0 0
    %1840 = vmatpush1.bf16.xpose.msra.mxu0 0
    %1841 = vmatprep.subr.bf16.mxu0 0
    %1842 = vmatpush1.bf16.xpose.msra.mxu0 0
    %1843 = vmatprep.subr.bf16.mxu0 0
    %1844 = vmatpush1.bf16.xpose.msra.mxu0 0
    %1845 = vmatprep.subr.bf16.mxu0 0
    %1846 = vmatpush1.bf16.xpose.msra.mxu0 0
    %1847 = vmatprep.subr.bf16.mxu0 0
    %1848 = vmatpush1.bf16.xpose.msra.mxu0 0
    %1849 = vmatprep.subr.bf16.mxu0 0
    %1850 = vmatpush1.bf16.xpose.msra.mxu0 0
    %1851 = vmatprep.subr.bf16.mxu0 0
    %1852 = vmatpush1.bf16.xpose.msra.mxu0 0
    %1853 = vmatprep.subr.bf16.mxu0 0
    %1854 = vmatpush1.bf16.xpose.msra.mxu0 0
    %1855 = vmatprep.subr.bf16.mxu0 0
    %1856 = vmatpush1.bf16.xpose.msra.mxu0 0
    %1857 = vmatprep.mubr.bf16.mxu0 0
    %1858 = vmatmul.mubr.bf16.gmra.mrb[0].mxu0 %v1820
    %v1859 = vpop.f32.mrb[0].mxu0
    %v1860 = vadd.f32 0.0, %v1859
    %v1861 = vpop.f32.mrb[0].mxu0
    %v1862 = vpop.f32.mrb[0].mxu0
    %v1863 = vpop.f32.mrb[0].mxu0
    %1864 = vdwg.mxu0
    %1865 = vrot.lane.b32.xlu0 %v294, 80
    %v1866 = vpop.permute.xlu0 %1865
    %1867 = vrot.lane.b32.xlu0 %v298, 16
    %v1868 = vpop.permute.xlu0 %1867
    %v1870 = vsel %vm322, %v1866, 0
    %v1873 = vsel %vm322, %v1868, 0
    %1875 = vmatprep.subr.bf16.mxu0 0
    %1876 = vmatpush1.bf16.xpose.msra.mxu0 %v1873
    %1877 = vmatprep.subr.bf16.mxu0 0
    %1878 = vmatpush1.bf16.xpose.msra.mxu0 0
    %1879 = vmatprep.subr.bf16.mxu0 0
    %1880 = vmatpush1.bf16.xpose.msra.mxu0 0
    %1881 = vmatprep.subr.bf16.mxu0 0
    %1882 = vmatpush1.bf16.xpose.msra.mxu0 0
    %1883 = vmatprep.subr.bf16.mxu0 0
    %1884 = vmatpush1.bf16.xpose.msra.mxu0 0
    %1885 = vmatprep.subr.bf16.mxu0 0
    %1886 = vmatpush1.bf16.xpose.msra.mxu0 0
    %1887 = vmatprep.subr.bf16.mxu0 0
    %1888 = vmatpush1.bf16.xpose.msra.mxu0 0
    %1889 = vmatprep.subr.bf16.mxu0 0
    %1890 = vmatpush1.bf16.xpose.msra.mxu0 0
    %1891 = vmatprep.subr.bf16.mxu0 0
    %1892 = vmatpush1.bf16.xpose.msra.mxu0 0
    %1893 = vmatprep.subr.bf16.mxu0 0
    %1894 = vmatpush1.bf16.xpose.msra.mxu0 0
    %1895 = vmatprep.subr.bf16.mxu0 0
    %1896 = vmatpush1.bf16.xpose.msra.mxu0 0
    %1897 = vmatprep.subr.bf16.mxu0 0
    %1898 = vmatpush1.bf16.xpose.msra.mxu0 0
    %1899 = vmatprep.subr.bf16.mxu0 0
    %1900 = vmatpush1.bf16.xpose.msra.mxu0 0
    %1901 = vmatprep.subr.bf16.mxu0 0
    %1902 = vmatpush1.bf16.xpose.msra.mxu0 0
    %1903 = vmatprep.subr.bf16.mxu0 0
    %1904 = vmatpush1.bf16.xpose.msra.mxu0 0
    %1905 = vmatprep.subr.bf16.mxu0 0
    %1906 = vmatpush1.bf16.xpose.msra.mxu0 0
    %1907 = vmatprep.mubr.bf16.mxu0 0
    %1908 = vmatmul.mubr.bf16.gmra.mrb[0].mxu0 %v1870
    %v1909 = vpop.f32.mrb[0].mxu0
    %v1910 = vadd.f32 0.0, %v1909
    %v1911 = vpop.f32.mrb[0].mxu0
    %v1912 = vpop.f32.mrb[0].mxu0
    %v1913 = vpop.f32.mrb[0].mxu0
    %1914 = vdwg.mxu0
    %1915 = vrot.lane.b32.xlu0 %v295, 80
    %v1916 = vpop.permute.xlu0 %1915
    %1917 = vrot.lane.b32.xlu0 %v299, 16
    %v1918 = vpop.permute.xlu0 %1917
    %v1920 = vsel %vm322, %v1916, 0
    %v1923 = vsel %vm322, %v1918, 0
    %1925 = vmatprep.subr.bf16.mxu0 0
    %1926 = vmatpush1.bf16.xpose.msra.mxu0 %v1923
    %1927 = vmatprep.subr.bf16.mxu0 0
    %1928 = vmatpush1.bf16.xpose.msra.mxu0 0
    %1929 = vmatprep.subr.bf16.mxu0 0
    %1930 = vmatpush1.bf16.xpose.msra.mxu0 0
    %1931 = vmatprep.subr.bf16.mxu0 0
    %1932 = vmatpush1.bf16.xpose.msra.mxu0 0
    %1933 = vmatprep.subr.bf16.mxu0 0
    %1934 = vmatpush1.bf16.xpose.msra.mxu0 0
    %1935 = vmatprep.subr.bf16.mxu0 0
    %1936 = vmatpush1.bf16.xpose.msra.mxu0 0
    %1937 = vmatprep.subr.bf16.mxu0 0
    %1938 = vmatpush1.bf16.xpose.msra.mxu0 0
    %1939 = vmatprep.subr.bf16.mxu0 0
    %1940 = vmatpush1.bf16.xpose.msra.mxu0 0
    %1941 = vmatprep.subr.bf16.mxu0 0
    %1942 = vmatpush1.bf16.xpose.msra.mxu0 0
    %1943 = vmatprep.subr.bf16.mxu0 0
    %1944 = vmatpush1.bf16.xpose.msra.mxu0 0
    %1945 = vmatprep.subr.bf16.mxu0 0
    %1946 = vmatpush1.bf16.xpose.msra.mxu0 0
    %1947 = vmatprep.subr.bf16.mxu0 0
    %1948 = vmatpush1.bf16.xpose.msra.mxu0 0
    %1949 = vmatprep.subr.bf16.mxu0 0
    %1950 = vmatpush1.bf16.xpose.msra.mxu0 0
    %1951 = vmatprep.subr.bf16.mxu0 0
    %1952 = vmatpush1.bf16.xpose.msra.mxu0 0
    %1953 = vmatprep.subr.bf16.mxu0 0
    %1954 = vmatpush1.bf16.xpose.msra.mxu0 0
    %1955 = vmatprep.subr.bf16.mxu0 0
    %1956 = vmatpush1.bf16.xpose.msra.mxu0 0
    %1957 = vmatprep.mubr.bf16.mxu0 0
    %1958 = vmatmul.mubr.bf16.gmra.mrb[0].mxu0 %v1920
    %v1959 = vpop.f32.mrb[0].mxu0
    %v1960 = vadd.f32 0.0, %v1959
    %v1961 = vpop.f32.mrb[0].mxu0
    %v1962 = vpop.f32.mrb[0].mxu0
    %v1963 = vpop.f32.mrb[0].mxu0
    %1964 = vdwg.mxu0
    %1965 = vrot.lane.b32.xlu0 %v296, 80
    %v1966 = vpop.permute.xlu0 %1965
    %1967 = vrot.lane.b32.xlu0 %v300, 16
    %v1968 = vpop.permute.xlu0 %1967
    %v1970 = vsel %vm322, %v1966, 0
    %v1973 = vsel %vm322, %v1968, 0
    %1975 = vmatprep.subr.bf16.mxu0 0
    %1976 = vmatpush1.bf16.xpose.msra.mxu0 %v1973
    %1977 = vmatprep.subr.bf16.mxu0 0
    %1978 = vmatpush1.bf16.xpose.msra.mxu0 0
    %1979 = vmatprep.subr.bf16.mxu0 0
    %1980 = vmatpush1.bf16.xpose.msra.mxu0 0
    %1981 = vmatprep.subr.bf16.mxu0 0
    %1982 = vmatpush1.bf16.xpose.msra.mxu0 0
    %1983 = vmatprep.subr.bf16.mxu0 0
    %1984 = vmatpush1.bf16.xpose.msra.mxu0 0
    %1985 = vmatprep.subr.bf16.mxu0 0
    %1986 = vmatpush1.bf16.xpose.msra.mxu0 0
    %1987 = vmatprep.subr.bf16.mxu0 0
    %1988 = vmatpush1.bf16.xpose.msra.mxu0 0
    %1989 = vmatprep.subr.bf16.mxu0 0
    %1990 = vmatpush1.bf16.xpose.msra.mxu0 0
    %1991 = vmatprep.subr.bf16.mxu0 0
    %1992 = vmatpush1.bf16.xpose.msra.mxu0 0
    %1993 = vmatprep.subr.bf16.mxu0 0
    %1994 = vmatpush1.bf16.xpose.msra.mxu0 0
    %1995 = vmatprep.subr.bf16.mxu0 0
    %1996 = vmatpush1.bf16.xpose.msra.mxu0 0
    %1997 = vmatprep.subr.bf16.mxu0 0
    %1998 = vmatpush1.bf16.xpose.msra.mxu0 0
    %1999 = vmatprep.subr.bf16.mxu0 0
    %2000 = vmatpush1.bf16.xpose.msra.mxu0 0
    %2001 = vmatprep.subr.bf16.mxu0 0
    %2002 = vmatpush1.bf16.xpose.msra.mxu0 0
    %2003 = vmatprep.subr.bf16.mxu0 0
    %2004 = vmatpush1.bf16.xpose.msra.mxu0 0
    %2005 = vmatprep.subr.bf16.mxu0 0
    %2006 = vmatpush1.bf16.xpose.msra.mxu0 0
    %2007 = vmatprep.mubr.bf16.mxu0 0
    %2008 = vmatmul.mubr.bf16.gmra.mrb[0].mxu0 %v1970
    %v2009 = vpop.f32.mrb[0].mxu0
    %v2010 = vadd.f32 0.0, %v2009
    %v2011 = vpop.f32.mrb[0].mxu0
    %v2012 = vpop.f32.mrb[0].mxu0
    %v2013 = vpop.f32.mrb[0].mxu0
    %2014 = vdwg.mxu0
    %v2015 = vsel %vm517, %v1860, -2.3819763e+38
    %v2016 = vsel %vm517, %v1910, -2.3819763e+38
    %v2017 = vsel %vm517, %v1960, -2.3819763e+38
    %v2018 = vsel %vm517, %v2010, -2.3819763e+38
    %v2019 = vsel %vm322, %v2015, -inf
    %2020 = vmax.xlane.f32.xlu0 %v2019
    %v2021 = vpop.xlane.xlu0 %2020
    %v2022 = vsel %vm322, %v2016, -inf
    %2023 = vmax.xlane.f32.xlu0 %v2022
    %v2024 = vpop.xlane.xlu0 %2023
    %v2025 = vsel %vm322, %v2017, -inf
    %2026 = vmax.xlane.f32.xlu0 %v2025
    %v2027 = vpop.xlane.xlu0 %2026
    %v2028 = vsel %vm322, %v2018, -inf
    %2029 = vmax.xlane.f32.xlu0 %v2028
    %v2030 = vpop.xlane.xlu0 %2029
    %v2031 = vsub.f32 %v2015, %v2021
    %v2032 = vsub.f32 %v2016, %v2024
    %v2033 = vsub.f32 %v2017, %v2027
    %v2034 = vsub.f32 %v2018, %v2030
    %v2035 = vmul.f32 %v2031, 1.442695
    %v2036 = vpow.pop %v2035
    %v2037 = vmul.f32 %v2032, 1.442695
    %v2038 = vpow.pop %v2037
    %v2039 = vmul.f32 %v2033, 1.442695
    %v2040 = vpow.pop %v2039
    %v2041 = vmul.f32 %v2034, 1.442695
    %v2042 = vpow.pop %v2041
    %v2043 = vsel %vm322, %v2036, 0.0
    %2044 = vadd.xlane.f32.xlu0 %v2043
    %v2045 = vpop.xlane.xlu0 %2044
    %v2046 = vsel %vm322, %v2038, 0.0
    %2047 = vadd.xlane.f32.xlu0 %v2046
    %v2048 = vpop.xlane.xlu0 %2047
    %v2049 = vsel %vm322, %v2040, 0.0
    %2050 = vadd.xlane.f32.xlu0 %v2049
    %v2051 = vpop.xlane.xlu0 %2050
    %v2052 = vsel %vm322, %v2042, 0.0
    %2053 = vadd.xlane.f32.xlu0 %v2052
    %v2054 = vpop.xlane.xlu0 %2053
    %v2055 = vrcp.pop %v2045
    %v2056 = vrcp.pop %v2048
    %v2057 = vrcp.pop %v2051
    %v2058 = vrcp.pop %v2054
    %v2059 = vmul.f32 %v2036, %v2055
    %v2060 = vmul.f32 %v2038, %v2056
    %v2061 = vmul.f32 %v2040, %v2057
    %v2062 = vmul.f32 %v2042, %v2058
    %v2063 = vpack.c.bf16 %v2059, %v2059
    %v2064 = vpack.c.bf16 %v2060, %v2060
    %v2065 = vpack.c.bf16 %v2061, %v2061
    %v2066 = vpack.c.bf16 %v2062, %v2062
    %2067 = vrot.lane.b32.xlu0 %v301, 80
    %v2068 = vpop.permute.xlu0 %2067
    %v2071 = vsel %vm322, %v2063, 0
    %2073 = vmatprep.subr.bf16.mxu0 0
    %2074 = vmatpush1.bf16.msra.mxu0 %v2068
    %2075 = vmatprep.subr.bf16.mxu0 0
    %2076 = vmatpush1.bf16.msra.mxu0 0
    %2077 = vmatprep.subr.bf16.mxu0 0
    %2078 = vmatpush1.bf16.msra.mxu0 0
    %2079 = vmatprep.subr.bf16.mxu0 0
    %2080 = vmatpush1.bf16.msra.mxu0 0
    %2081 = vmatprep.subr.bf16.mxu0 0
    %2082 = vmatpush1.bf16.msra.mxu0 0
    %2083 = vmatprep.subr.bf16.mxu0 0
    %2084 = vmatpush1.bf16.msra.mxu0 0
    %2085 = vmatprep.subr.bf16.mxu0 0
    %2086 = vmatpush1.bf16.msra.mxu0 0
    %2087 = vmatprep.subr.bf16.mxu0 0
    %2088 = vmatpush1.bf16.msra.mxu0 0
    %2089 = vmatprep.subr.bf16.mxu0 0
    %2090 = vmatpush1.bf16.msra.mxu0 0
    %2091 = vmatprep.subr.bf16.mxu0 0
    %2092 = vmatpush1.bf16.msra.mxu0 0
    %2093 = vmatprep.subr.bf16.mxu0 0
    %2094 = vmatpush1.bf16.msra.mxu0 0
    %2095 = vmatprep.subr.bf16.mxu0 0
    %2096 = vmatpush1.bf16.msra.mxu0 0
    %2097 = vmatprep.subr.bf16.mxu0 0
    %2098 = vmatpush1.bf16.msra.mxu0 0
    %2099 = vmatprep.subr.bf16.mxu0 0
    %2100 = vmatpush1.bf16.msra.mxu0 0
    %2101 = vmatprep.subr.bf16.mxu0 0
    %2102 = vmatpush1.bf16.msra.mxu0 0
    %2103 = vmatprep.subr.bf16.mxu0 0
    %2104 = vmatpush1.bf16.msra.mxu0 0
    %2105 = vmatprep.mubr.bf16.mxu0 0
    %2106 = vmatmul.mubr.bf16.gmra.mrb[0].mxu0 %v2071
    %v2107 = vpop.f32.mrb[0].mxu0
    %v2108 = vadd.f32 0.0, %v2107
    %v2109 = vpop.f32.mrb[0].mxu0
    %v2110 = vpop.f32.mrb[0].mxu0
    %v2111 = vpop.f32.mrb[0].mxu0
    %2112 = vdwg.mxu0
    %2113 = vrot.lane.b32.xlu0 %v302, 80
    %v2114 = vpop.permute.xlu0 %2113
    %v2117 = vsel %vm322, %v2064, 0
    %2119 = vmatprep.subr.bf16.mxu0 0
    %2120 = vmatpush1.bf16.msra.mxu0 %v2114
    %2121 = vmatprep.subr.bf16.mxu0 0
    %2122 = vmatpush1.bf16.msra.mxu0 0
    %2123 = vmatprep.subr.bf16.mxu0 0
    %2124 = vmatpush1.bf16.msra.mxu0 0
    %2125 = vmatprep.subr.bf16.mxu0 0
    %2126 = vmatpush1.bf16.msra.mxu0 0
    %2127 = vmatprep.subr.bf16.mxu0 0
    %2128 = vmatpush1.bf16.msra.mxu0 0
    %2129 = vmatprep.subr.bf16.mxu0 0
    %2130 = vmatpush1.bf16.msra.mxu0 0
    %2131 = vmatprep.subr.bf16.mxu0 0
    %2132 = vmatpush1.bf16.msra.mxu0 0
    %2133 = vmatprep.subr.bf16.mxu0 0
    %2134 = vmatpush1.bf16.msra.mxu0 0
    %2135 = vmatprep.subr.bf16.mxu0 0
    %2136 = vmatpush1.bf16.msra.mxu0 0
    %2137 = vmatprep.subr.bf16.mxu0 0
    %2138 = vmatpush1.bf16.msra.mxu0 0
    %2139 = vmatprep.subr.bf16.mxu0 0
    %2140 = vmatpush1.bf16.msra.mxu0 0
    %2141 = vmatprep.subr.bf16.mxu0 0
    %2142 = vmatpush1.bf16.msra.mxu0 0
    %2143 = vmatprep.subr.bf16.mxu0 0
    %2144 = vmatpush1.bf16.msra.mxu0 0
    %2145 = vmatprep.subr.bf16.mxu0 0
    %2146 = vmatpush1.bf16.msra.mxu0 0
    %2147 = vmatprep.subr.bf16.mxu0 0
    %2148 = vmatpush1.bf16.msra.mxu0 0
    %2149 = vmatprep.subr.bf16.mxu0 0
    %2150 = vmatpush1.bf16.msra.mxu0 0
    %2151 = vmatprep.mubr.bf16.mxu0 0
    %2152 = vmatmul.mubr.bf16.gmra.mrb[0].mxu0 %v2117
    %v2153 = vpop.f32.mrb[0].mxu0
    %v2154 = vadd.f32 0.0, %v2153
    %v2155 = vpop.f32.mrb[0].mxu0
    %v2156 = vpop.f32.mrb[0].mxu0
    %v2157 = vpop.f32.mrb[0].mxu0
    %2158 = vdwg.mxu0
    %2159 = vrot.lane.b32.xlu0 %v303, 80
    %v2160 = vpop.permute.xlu0 %2159
    %v2163 = vsel %vm322, %v2065, 0
    %2165 = vmatprep.subr.bf16.mxu0 0
    %2166 = vmatpush1.bf16.msra.mxu0 %v2160
    %2167 = vmatprep.subr.bf16.mxu0 0
    %2168 = vmatpush1.bf16.msra.mxu0 0
    %2169 = vmatprep.subr.bf16.mxu0 0
    %2170 = vmatpush1.bf16.msra.mxu0 0
    %2171 = vmatprep.subr.bf16.mxu0 0
    %2172 = vmatpush1.bf16.msra.mxu0 0
    %2173 = vmatprep.subr.bf16.mxu0 0
    %2174 = vmatpush1.bf16.msra.mxu0 0
    %2175 = vmatprep.subr.bf16.mxu0 0
    %2176 = vmatpush1.bf16.msra.mxu0 0
    %2177 = vmatprep.subr.bf16.mxu0 0
    %2178 = vmatpush1.bf16.msra.mxu0 0
    %2179 = vmatprep.subr.bf16.mxu0 0
    %2180 = vmatpush1.bf16.msra.mxu0 0
    %2181 = vmatprep.subr.bf16.mxu0 0
    %2182 = vmatpush1.bf16.msra.mxu0 0
    %2183 = vmatprep.subr.bf16.mxu0 0
    %2184 = vmatpush1.bf16.msra.mxu0 0
    %2185 = vmatprep.subr.bf16.mxu0 0
    %2186 = vmatpush1.bf16.msra.mxu0 0
    %2187 = vmatprep.subr.bf16.mxu0 0
    %2188 = vmatpush1.bf16.msra.mxu0 0
    %2189 = vmatprep.subr.bf16.mxu0 0
    %2190 = vmatpush1.bf16.msra.mxu0 0
    %2191 = vmatprep.subr.bf16.mxu0 0
    %2192 = vmatpush1.bf16.msra.mxu0 0
    %2193 = vmatprep.subr.bf16.mxu0 0
    %2194 = vmatpush1.bf16.msra.mxu0 0
    %2195 = vmatprep.subr.bf16.mxu0 0
    %2196 = vmatpush1.bf16.msra.mxu0 0
    %2197 = vmatprep.mubr.bf16.mxu0 0
    %2198 = vmatmul.mubr.bf16.gmra.mrb[0].mxu0 %v2163
    %v2199 = vpop.f32.mrb[0].mxu0
    %v2200 = vadd.f32 0.0, %v2199
    %v2201 = vpop.f32.mrb[0].mxu0
    %v2202 = vpop.f32.mrb[0].mxu0
    %v2203 = vpop.f32.mrb[0].mxu0
    %2204 = vdwg.mxu0
    %2205 = vrot.lane.b32.xlu0 %v304, 80
    %v2206 = vpop.permute.xlu0 %2205
    %v2209 = vsel %vm322, %v2066, 0
    %2211 = vmatprep.subr.bf16.mxu0 0
    %2212 = vmatpush1.bf16.msra.mxu0 %v2206
    %2213 = vmatprep.subr.bf16.mxu0 0
    %2214 = vmatpush1.bf16.msra.mxu0 0
    %2215 = vmatprep.subr.bf16.mxu0 0
    %2216 = vmatpush1.bf16.msra.mxu0 0
    %2217 = vmatprep.subr.bf16.mxu0 0
    %2218 = vmatpush1.bf16.msra.mxu0 0
    %2219 = vmatprep.subr.bf16.mxu0 0
    %2220 = vmatpush1.bf16.msra.mxu0 0
    %2221 = vmatprep.subr.bf16.mxu0 0
    %2222 = vmatpush1.bf16.msra.mxu0 0
    %2223 = vmatprep.subr.bf16.mxu0 0
    %2224 = vmatpush1.bf16.msra.mxu0 0
    %2225 = vmatprep.subr.bf16.mxu0 0
    %2226 = vmatpush1.bf16.msra.mxu0 0
    %2227 = vmatprep.subr.bf16.mxu0 0
    %2228 = vmatpush1.bf16.msra.mxu0 0
    %2229 = vmatprep.subr.bf16.mxu0 0
    %2230 = vmatpush1.bf16.msra.mxu0 0
    %2231 = vmatprep.subr.bf16.mxu0 0
    %2232 = vmatpush1.bf16.msra.mxu0 0
    %2233 = vmatprep.subr.bf16.mxu0 0
    %2234 = vmatpush1.bf16.msra.mxu0 0
    %2235 = vmatprep.subr.bf16.mxu0 0
    %2236 = vmatpush1.bf16.msra.mxu0 0
    %2237 = vmatprep.subr.bf16.mxu0 0
    %2238 = vmatpush1.bf16.msra.mxu0 0
    %2239 = vmatprep.subr.bf16.mxu0 0
    %2240 = vmatpush1.bf16.msra.mxu0 0
    %2241 = vmatprep.subr.bf16.mxu0 0
    %2242 = vmatpush1.bf16.msra.mxu0 0
    %2243 = vmatprep.mubr.bf16.mxu0 0
    %2244 = vmatmul.mubr.bf16.gmra.mrb[0].mxu0 %v2209
    %v2245 = vpop.f32.mrb[0].mxu0
    %v2246 = vadd.f32 0.0, %v2245
    %v2247 = vpop.f32.mrb[0].mxu0
    %v2248 = vpop.f32.mrb[0].mxu0
    %v2249 = vpop.f32.mrb[0].mxu0
    %2250 = vdwg.mxu0
    %v2251 = vpack.c.bf16 %v2154, %v2108
    %v2252 = vpack.c.bf16 %v2246, %v2200
    %v2255 = vunpack.c.l.b16 %v311
    %v2256 = vunpack.c.l.b16 %v312
    %v2257 = vpack.c.b16 %v2256, %v2255
    %v2260 = vsel %vm322, %v2251, 0
    %v2263 = vsel %vm322, %v2252, 0
    %2265 = vmatprep.subr.bf16.mxu0 0
    %2266 = vmatpush1.bf16.msra.mxu0 %v2257
    %2267 = vmatprep.subr.bf16.mxu0 0
    %2268 = vmatpush1.bf16.msra.mxu0 0
    %2269 = vmatprep.subr.bf16.mxu0 0
    %2270 = vmatpush1.bf16.msra.mxu0 0
    %2271 = vmatprep.subr.bf16.mxu0 0
    %2272 = vmatpush1.bf16.msra.mxu0 0
    %2273 = vmatprep.subr.bf16.mxu0 0
    %2274 = vmatpush1.bf16.msra.mxu0 0
    %2275 = vmatprep.subr.bf16.mxu0 0
    %2276 = vmatpush1.bf16.msra.mxu0 0
    %2277 = vmatprep.subr.bf16.mxu0 0
    %2278 = vmatpush1.bf16.msra.mxu0 0
    %2279 = vmatprep.subr.bf16.mxu0 0
    %2280 = vmatpush1.bf16.msra.mxu0 0
    %2281 = vmatprep.subr.bf16.mxu0 0
    %2282 = vmatpush1.bf16.msra.mxu0 0
    %2283 = vmatprep.subr.bf16.mxu0 0
    %2284 = vmatpush1.bf16.msra.mxu0 0
    %2285 = vmatprep.subr.bf16.mxu0 0
    %2286 = vmatpush1.bf16.msra.mxu0 0
    %2287 = vmatprep.subr.bf16.mxu0 0
    %2288 = vmatpush1.bf16.msra.mxu0 0
    %2289 = vmatprep.subr.bf16.mxu0 0
    %2290 = vmatpush1.bf16.msra.mxu0 0
    %2291 = vmatprep.subr.bf16.mxu0 0
    %2292 = vmatpush1.bf16.msra.mxu0 0
    %2293 = vmatprep.subr.bf16.mxu0 0
    %2294 = vmatpush1.bf16.msra.mxu0 0
    %2295 = vmatprep.subr.bf16.mxu0 0
    %2296 = vmatpush1.bf16.msra.mxu0 0
    %2297 = vmatprep.mubr.bf16.mxu0 0
    %2298 = vmatmul.mubr.bf16.gmra.mrb[0].mxu0 %v2260
    %v2299 = vpop.f32.mrb[0].mxu0
    %v2300 = vadd.f32 0.0, %v2299
    %v2301 = vpop.f32.mrb[0].mxu0
    %v2302 = vpop.f32.mrb[0].mxu0
    %v2303 = vadd.f32 0.0, %v2302
    %v2304 = vpop.f32.mrb[0].mxu0
    %2305 = vmatprep.mubr.bf16.mxu0 0
    %2306 = vmatmul.mubr.bf16.gmra.mrb[0].mxu0 %v2263
    %v2307 = vpop.f32.mrb[0].mxu0
    %v2308 = vadd.f32 0.0, %v2307
    %v2309 = vpop.f32.mrb[0].mxu0
    %v2310 = vpop.f32.mrb[0].mxu0
    %v2311 = vadd.f32 0.0, %v2310
    %v2312 = vpop.f32.mrb[0].mxu0
    %2313 = vdwg.mxu0
    %v2314 = vadd.f32 %v1811, %v2300
    %v2315 = vadd.f32 %v1812, %v2303
    %v2316 = vadd.f32 %v1813, %v2308
    %v2317 = vadd.f32 %v1814, %v2311
    %2318 = vst.msk [vmem:[#allocation2] sm:$0xff] %vm146, %v2314
    %2319 = vst.msk [vmem:[#allocation2 + $0x8] sm:$0xff] %vm146, %v2315
    %2320 = vst.msk [vmem:[#allocation2 + $0x10] sm:$0xff] %vm146, %v2316
    %2321 = vst.msk [vmem:[#allocation2 + $0x18] sm:$0xff] %vm146, %v2317
    // Predicated region
    $region18: #{tpu_custom_call.1} parent=1 // pred_check
      _
    $region19: #{tpu_custom_call.1} parent=1 // pred_check_branch
      %2323 = sbr.rel (0) target = $region21
    $region20: #{tpu_custom_call.1} parent=1 // pred_region
      %s2325 = ssub.s32 512, 512
      %2326 = vsyncadd [#allocation3], %s2325
      %s2327 = sshll.u32 [#allocation2], 4
      %s2328 = int_to_ptr.vmem [resolvable:$true] %s2327
      %2333 = dma.vmem_to_hbm [thread:$0]  %s2328, 512, %s4, [#allocation3], 128, 128, 8
    $region21: #{tpu_custom_call.1} parent=1 // pred_fallthru
      _
    // Predicated region
    $region22: #{tpu_custom_call.1} parent=1 // pred_check
      _
    $region23: #{tpu_custom_call.1} parent=1 // pred_check_branch
      %2335 = sbr.rel (0) target = $region25
    $region24: #{tpu_custom_call.1} parent=1 // pred_region
      %2336 = dma.done [#allocation3], 512
    $region25: #{tpu_custom_call.1} parent=1 // pred_fallthru
      _
    %2337 = vsyncpa [#allocation3], 1

</llo_original>
